<compile_context>
chip_gen: v7x
topology: tpu7x:2x2x1
jax: 0.10.0
libtpu: 0.0.40
codegen_flags: <defaults>
</compile_context>

<pallas_src>
import functools

import jax
import jax.numpy as jnp
from jax.experimental import pallas as pl
from jax.experimental.pallas import tpu as pltpu


def _gru_kernel(gx_ref, whh_ref, bhn_ref, wlin_ref, blin_ref, out_ref, hs_sc,
                *, seq_len, batch_p, hidden_p):
    """Serial GRU recurrence + linear head.

    gx_ref   : (T, Bp, 3*Hp)  hoisted input projection, biases (b_i*, b_hr, b_hz) folded
    whh_ref  : (Hp, 3*Hp)     padded, lane-aligned W_hh^T (gate g at cols [g*Hp, g*Hp+H))
    bhn_ref  : (1, Hp)        b_hn (must stay inside the r*(...) term)
    wlin_ref : (Hp, Op)       padded linear head
    blin_ref : (1, Op)
    out_ref  : (T*Bp, Op)
    hs_sc    : VMEM (T, Bp, Hp) hidden-state slab
    """
    T, Bp, Hp = seq_len, batch_p, hidden_p

    whh = whh_ref[...]                                   # (Hp, 3*Hp), loaded once
    bhn = jnp.broadcast_to(bhn_ref[...], (Bp, Hp))       # hoisted broadcast (once)

    h = jnp.zeros((Bp, Hp), jnp.float32)                 # (8, 128) = exactly one vreg
    # Static unroll over time: every slab access below is a static, fully
    # sublane/lane-aligned tile.  (For large T: lax.fori_loop with bounded unroll.)
    for t in range(T):
        gx = gx_ref[t]                                   # (Bp, 3*Hp), static slice
        gh = jnp.dot(h, whh, preferred_element_type=jnp.float32)   # (Bp, 3*Hp)
        # r and z share one fused sigmoid (single EUP push per step).
        rz = jax.nn.sigmoid(gx[:, :2 * Hp] + gh[:, :2 * Hp])
        r = rz[:, :Hp]
        z = rz[:, Hp:]
        n = jnp.tanh(gx[:, 2 * Hp:] + r * (gh[:, 2 * Hp:] + bhn))
        h = (1.0 - z) * n + z * h
        hs_sc[t] = h                                     # static, aligned store

    # Linear head: one matmul + one lane-dense (width Op=128) store.
    hs = hs_sc[...].reshape(T * Bp, Hp)
    out_ref[...] = (
        jnp.dot(hs, wlin_ref[...], preferred_element_type=jnp.float32)
        + blin_ref[...]).astype(out_ref.dtype)


def gru_forward(x_btf, w_ih, w_hh, b_ih, b_hh, w_lin, b_lin):
    """x_btf: (B, T, F) f32 -> (B, T, n_outputs).

    Matches torch.nn.GRU(batch_first=True, num_layers=1, h0=0) followed by
    nn.Linear (gate order r, z, n; n-gate uses r * (h @ W_hn^T + b_hn))."""
    B, T, F = x_btf.shape
    H = w_hh.shape[1]
    O = w_lin.shape[0]
    f32 = jnp.float32

    Bp = max(8, ((B + 7) // 8) * 8)            # sublane-aligned batch
    Hp = max(128, ((H + 127) // 128) * 128)    # lane-aligned per-gate width
    Op = max(128, ((O + 127) // 128) * 128)    # lane-dense output width

    # --- split gate weights (torch order r, z, n) ---
    wir, wiz, win = w_ih[0:H], w_ih[H:2 * H], w_ih[2 * H:3 * H]      # (H, F)
    whr, whz, whn = w_hh[0:H], w_hh[H:2 * H], w_hh[2 * H:3 * H]      # (H, H)
    bir, biz, bin_ = b_ih[0:H], b_ih[H:2 * H], b_ih[2 * H:3 * H]
    bhr, bhz, bhn = b_hh[0:H], b_hh[H:2 * H], b_hh[2 * H:3 * H]

    # --- padded, lane-aligned recurrent weights / biases ---
    whh_p = jnp.zeros((Hp, 3 * Hp), f32)
    whh_p = whh_p.at[:H, 0 * Hp:0 * Hp + H].set(whr.T)
    whh_p = whh_p.at[:H, 1 * Hp:1 * Hp + H].set(whz.T)
    whh_p = whh_p.at[:H, 2 * Hp:2 * Hp + H].set(whn.T)
    bhn_p = jnp.zeros((1, Hp), f32).at[0, :H].set(bhn)

    wlin_p = jnp.zeros((Hp, Op), f32).at[:H, :O].set(w_lin.T)
    blin_p = jnp.zeros((1, Op), f32).at[0, :O].set(b_lin)

    # --- hoisted input projection in plain XLA (K=F is tiny; off the serial path) ---
    # b_hr / b_hz are folded here; b_hn must stay inside the per-step r*(...) term.
    x_tbf = jnp.transpose(x_btf, (1, 0, 2)).astype(f32)              # (T, B, F)
    gxr = x_tbf @ wir.T + (bir + bhr)                                # (T, B, H)
    gxz = x_tbf @ wiz.T + (biz + bhz)
    gxn = x_tbf @ win.T + bin_
    gx = jnp.zeros((T, Bp, 3 * Hp), f32)
    gx = gx.at[:, :B, 0 * Hp:0 * Hp + H].set(gxr)
    gx = gx.at[:, :B, 1 * Hp:1 * Hp + H].set(gxz)
    gx = gx.at[:, :B, 2 * Hp:2 * Hp + H].set(gxn)

    kernel = functools.partial(_gru_kernel, seq_len=T, batch_p=Bp, hidden_p=Hp)

    out_flat = pl.pallas_call(
        kernel,
        out_shape=jax.ShapeDtypeStruct((T * Bp, Op), f32),
        grid=(1,),
        in_specs=[
            pl.BlockSpec((T, Bp, 3 * Hp), lambda i: (0, 0, 0)),   # gx
            pl.BlockSpec((Hp, 3 * Hp), lambda i: (0, 0)),         # W_hh^T (padded)
            pl.BlockSpec((1, Hp), lambda i: (0, 0)),              # b_hn
            pl.BlockSpec((Hp, Op), lambda i: (0, 0)),             # W_lin^T (padded)
            pl.BlockSpec((1, Op), lambda i: (0, 0)),              # b_lin
        ],
        out_specs=pl.BlockSpec((T * Bp, Op), lambda i: (0, 0)),
        scratch_shapes=[
            pltpu.VMEM((T, Bp, Hp), f32),                          # hidden-state slab
        ],
        compiler_params=pltpu.CompilerParams(
            dimension_semantics=("arbitrary",),
        ),
    )(gx, whh_p, bhn_p, wlin_p, blin_p)

    # (T*Bp, Op) -> (T, Bp, Op) -> strip padding -> (B, T, O)
    out = out_flat.reshape(T, Bp, Op)[:, :B, :O]
    return jnp.transpose(out, (1, 0, 2))


def gru_reference(x_btf, w_ih, w_hh, b_ih, b_hh, w_lin, b_lin):
    """Pure-JAX reference matching torch.nn.GRU (gate order r, z, n) + Linear."""
    B, T, F = x_btf.shape
    H = w_hh.shape[1]

    def step(h, x_t):
        gx = x_t @ w_ih.T + b_ih
        gh = h @ w_hh.T + b_hh
        r = jax.nn.sigmoid(gx[:, 0 * H:1 * H] + gh[:, 0 * H:1 * H])
        z = jax.nn.sigmoid(gx[:, 1 * H:2 * H] + gh[:, 1 * H:2 * H])
        n = jnp.tanh(gx[:, 2 * H:3 * H] + r * gh[:, 2 * H:3 * H])
        h_new = (1.0 - z) * n + z * h
        return h_new, h_new

    h0 = jnp.zeros((B, H), jnp.float32)
    _, hs = jax.lax.scan(step, h0, jnp.transpose(x_btf, (1, 0, 2)))
    out = hs @ w_lin.T + b_lin                     # (T, B, O)
    return jnp.transpose(out, (1, 0, 2))


if __name__ == "__main__":
    # Model hyperparameters consistent with the module's forward.
    n_features, n_latents, n_outputs = 4, 32, 8
    batch, seq = 2, 8

    key = jax.random.PRNGKey(0)
    k_x, k_wih, k_whh, k_bih, k_bhh, k_wl, k_bl = jax.random.split(key, 7)

    # Deterministic init mimicking PyTorch's U(-1/sqrt(H), 1/sqrt(H)).
    bound = 1.0 / jnp.sqrt(jnp.float32(n_latents))
    w_ih = jax.random.uniform(k_wih, (3 * n_latents, n_features), jnp.float32, -bound, bound)
    w_hh = jax.random.uniform(k_whh, (3 * n_latents, n_latents), jnp.float32, -bound, bound)
    b_ih = jax.random.uniform(k_bih, (3 * n_latents,), jnp.float32, -bound, bound)
    b_hh = jax.random.uniform(k_bhh, (3 * n_latents,), jnp.float32, -bound, bound)
    w_lin = jax.random.uniform(k_wl, (n_outputs, n_latents), jnp.float32, -bound, bound)
    b_lin = jax.random.uniform(k_bl, (n_outputs,), jnp.float32, -bound, bound)

    x = jax.random.normal(k_x, (batch, seq, n_features), jnp.float32)

    out = gru_forward(x, w_ih, w_hh, b_ih, b_hh, w_lin, b_lin)
    out = jax.block_until_ready(out)

    ref = gru_reference(x, w_ih, w_hh, b_ih, b_hh, w_lin, b_lin)
    assert out.shape == (batch, seq, n_outputs)
    assert jnp.allclose(out, ref, atol=1e-5, rtol=1e-5), "mismatch vs reference"

    print("KERNEL_OK")
</pallas_src>

<mosaic_0001>
module attributes {stable_mosaic.version = 11 : i64} {
  func.func @_gru_kernel(%arg0: i32, %arg1: memref<8x8x384xf32, #tpu.memory_space<vmem>>, %arg2: memref<128x384xf32, #tpu.memory_space<vmem>>, %arg3: memref<1x128xf32, #tpu.memory_space<vmem>>, %arg4: memref<128x128xf32, #tpu.memory_space<vmem>>, %arg5: memref<1x128xf32, #tpu.memory_space<vmem>>, %arg6: memref<64x128xf32, #tpu.memory_space<vmem>>, %arg7: memref<8x8x128xf32, #tpu.memory_space<vmem>>) attributes {dimension_semantics = [#tpu.dimension_semantics<arbitrary>], iteration_bounds = array<i64: 1>, scalar_prefetch = 0 : i64, scratch_operands = 1 : i64, tpu.core_type = #tpu.core_type<tc>, window_params = [{pipeline_mode = #tpu.pipeline_mode<synchronous>, transform_indices = @transform_0, window_bounds = array<i64: 8, 8, 384>}, {pipeline_mode = #tpu.pipeline_mode<synchronous>, transform_indices = @transform_1, window_bounds = array<i64: 128, 384>}, {pipeline_mode = #tpu.pipeline_mode<synchronous>, transform_indices = @transform_2, window_bounds = array<i64: 1, 128>}, {pipeline_mode = #tpu.pipeline_mode<synchronous>, transform_indices = @transform_3, window_bounds = array<i64: 128, 128>}, {pipeline_mode = #tpu.pipeline_mode<synchronous>, transform_indices = @transform_4, window_bounds = array<i64: 1, 128>}, {pipeline_mode = #tpu.pipeline_mode<synchronous>, transform_indices = @transform_5, window_bounds = array<i64: 64, 128>}]} {
    %c0 = arith.constant 0 : index
    %c0_0 = arith.constant 0 : index
    %0 = vector.load %arg2[%c0, %c0_0] : memref<128x384xf32, #tpu.memory_space<vmem>>, vector<128x384xf32>
    %c0_1 = arith.constant 0 : index
    %c0_2 = arith.constant 0 : index
    %1 = vector.load %arg3[%c0_1, %c0_2] : memref<1x128xf32, #tpu.memory_space<vmem>>, vector<1x128xf32>
    %2 = vector.shape_cast %1 : vector<1x128xf32> to vector<1x128xf32>
    %3 = vector.broadcast %2 : vector<1x128xf32> to vector<8x128xf32>
    %cst = arith.constant 0.000000e+00 : f32
    %4 = vector.broadcast %cst : f32 to vector<8x128xf32>
    %c0_3 = arith.constant 0 : index
    %c0_4 = arith.constant 0 : index
    %c0_5 = arith.constant 0 : index
    %5 = vector.load %arg1[%c0_3, %c0_4, %c0_5] : memref<8x8x384xf32, #tpu.memory_space<vmem>>, vector<1x8x384xf32>
    %6 = vector.shape_cast %5 : vector<1x8x384xf32> to vector<8x384xf32>
    %cst_6 = arith.constant dense<0.000000e+00> : vector<8x384xf32>
    %7 = tpu.matmul %4, %0, %cst_6 {dimension_numbers = #tpu.dot_dimension_numbers<[1], [0], [0], [1], [0, 0, 1, 1], [], []>} : vector<8x128xf32>, vector<128x384xf32>, vector<8x384xf32> -> vector<8x384xf32>
    %8 = vector.extract_strided_slice %6 {offsets = [0, 0], sizes = [8, 256], strides = [1, 1]} : vector<8x384xf32> to vector<8x256xf32>
    %9 = vector.extract_strided_slice %7 {offsets = [0, 0], sizes = [8, 256], strides = [1, 1]} : vector<8x384xf32> to vector<8x256xf32>
    %10 = arith.addf %8, %9 : vector<8x256xf32>
    %11 = arith.negf %10 : vector<8x256xf32>
    %12 = math.exp %11 : vector<8x256xf32>
    %cst_7 = arith.constant 1.000000e+00 : f32
    %13 = vector.broadcast %cst_7 : f32 to vector<8x256xf32>
    %14 = arith.addf %13, %12 : vector<8x256xf32>
    %15 = arith.divf %13, %14 : vector<8x256xf32>
    %16 = vector.extract_strided_slice %15 {offsets = [0, 0], sizes = [8, 128], strides = [1, 1]} : vector<8x256xf32> to vector<8x128xf32>
    %17 = vector.extract_strided_slice %15 {offsets = [0, 128], sizes = [8, 128], strides = [1, 1]} : vector<8x256xf32> to vector<8x128xf32>
    %18 = vector.extract_strided_slice %6 {offsets = [0, 256], sizes = [8, 128], strides = [1, 1]} : vector<8x384xf32> to vector<8x128xf32>
    %19 = vector.extract_strided_slice %7 {offsets = [0, 256], sizes = [8, 128], strides = [1, 1]} : vector<8x384xf32> to vector<8x128xf32>
    %20 = arith.addf %19, %3 : vector<8x128xf32>
    %21 = arith.mulf %16, %20 : vector<8x128xf32>
    %22 = arith.addf %18, %21 : vector<8x128xf32>
    %23 = math.tanh %22 : vector<8x128xf32>
    %cst_8 = arith.constant 1.000000e+00 : f32
    %24 = vector.broadcast %cst_8 : f32 to vector<8x128xf32>
    %25 = arith.subf %24, %17 : vector<8x128xf32>
    %26 = arith.mulf %25, %23 : vector<8x128xf32>
    %27 = arith.mulf %17, %4 : vector<8x128xf32>
    %28 = arith.addf %26, %27 : vector<8x128xf32>
    %c0_9 = arith.constant 0 : index
    %c0_10 = arith.constant 0 : index
    %c0_11 = arith.constant 0 : index
    %29 = vector.load %arg7[%c0_9, %c0_10, %c0_11] : memref<8x8x128xf32, #tpu.memory_space<vmem>>, vector<1x8x128xf32>
    %30 = vector.shape_cast %29 : vector<1x8x128xf32> to vector<8x128xf32>
    %31 = vector.shape_cast %28 : vector<8x128xf32> to vector<1x8x128xf32>
    tpu.vector_store %arg7[%c0_9, %c0_10, %c0_11], %31 {strides = array<i32>} : memref<8x8x128xf32, #tpu.memory_space<vmem>>, vector<1x8x128xf32>,
    %c1 = arith.constant 1 : index
    %c0_12 = arith.constant 0 : index
    %c0_13 = arith.constant 0 : index
    %32 = vector.load %arg1[%c1, %c0_12, %c0_13] : memref<8x8x384xf32, #tpu.memory_space<vmem>>, vector<1x8x384xf32>
    %33 = vector.shape_cast %32 : vector<1x8x384xf32> to vector<8x384xf32>
    %cst_14 = arith.constant dense<0.000000e+00> : vector<8x384xf32>
    %34 = tpu.matmul %28, %0, %cst_14 {dimension_numbers = #tpu.dot_dimension_numbers<[1], [0], [0], [1], [0, 0, 1, 1], [], []>} : vector<8x128xf32>, vector<128x384xf32>, vector<8x384xf32> -> vector<8x384xf32>
    %35 = vector.extract_strided_slice %33 {offsets = [0, 0], sizes = [8, 256], strides = [1, 1]} : vector<8x384xf32> to vector<8x256xf32>
    %36 = vector.extract_strided_slice %34 {offsets = [0, 0], sizes = [8, 256], strides = [1, 1]} : vector<8x384xf32> to vector<8x256xf32>
    %37 = arith.addf %35, %36 : vector<8x256xf32>
    %38 = arith.negf %37 : vector<8x256xf32>
    %39 = math.exp %38 : vector<8x256xf32>
    %cst_15 = arith.constant 1.000000e+00 : f32
    %40 = vector.broadcast %cst_15 : f32 to vector<8x256xf32>
    %41 = arith.addf %40, %39 : vector<8x256xf32>
    %42 = arith.divf %40, %41 : vector<8x256xf32>
    %43 = vector.extract_strided_slice %42 {offsets = [0, 0], sizes = [8, 128], strides = [1, 1]} : vector<8x256xf32> to vector<8x128xf32>
    %44 = vector.extract_strided_slice %42 {offsets = [0, 128], sizes = [8, 128], strides = [1, 1]} : vector<8x256xf32> to vector<8x128xf32>
    %45 = vector.extract_strided_slice %33 {offsets = [0, 256], sizes = [8, 128], strides = [1, 1]} : vector<8x384xf32> to vector<8x128xf32>
    %46 = vector.extract_strided_slice %34 {offsets = [0, 256], sizes = [8, 128], strides = [1, 1]} : vector<8x384xf32> to vector<8x128xf32>
    %47 = arith.addf %46, %3 : vector<8x128xf32>
    %48 = arith.mulf %43, %47 : vector<8x128xf32>
    %49 = arith.addf %45, %48 : vector<8x128xf32>
    %50 = math.tanh %49 : vector<8x128xf32>
    %cst_16 = arith.constant 1.000000e+00 : f32
    %51 = vector.broadcast %cst_16 : f32 to vector<8x128xf32>
    %52 = arith.subf %51, %44 : vector<8x128xf32>
    %53 = arith.mulf %52, %50 : vector<8x128xf32>
    %54 = arith.mulf %44, %28 : vector<8x128xf32>
    %55 = arith.addf %53, %54 : vector<8x128xf32>
    %c1_17 = arith.constant 1 : index
    %c0_18 = arith.constant 0 : index
    %c0_19 = arith.constant 0 : index
    %56 = vector.load %arg7[%c1_17, %c0_18, %c0_19] : memref<8x8x128xf32, #tpu.memory_space<vmem>>, vector<1x8x128xf32>
    %57 = vector.shape_cast %56 : vector<1x8x128xf32> to vector<8x128xf32>
    %58 = vector.shape_cast %55 : vector<8x128xf32> to vector<1x8x128xf32>
    tpu.vector_store %arg7[%c1_17, %c0_18, %c0_19], %58 {strides = array<i32>} : memref<8x8x128xf32, #tpu.memory_space<vmem>>, vector<1x8x128xf32>,
    %c2 = arith.constant 2 : index
    %c0_20 = arith.constant 0 : index
    %c0_21 = arith.constant 0 : index
    %59 = vector.load %arg1[%c2, %c0_20, %c0_21] : memref<8x8x384xf32, #tpu.memory_space<vmem>>, vector<1x8x384xf32>
    %60 = vector.shape_cast %59 : vector<1x8x384xf32> to vector<8x384xf32>
    %cst_22 = arith.constant dense<0.000000e+00> : vector<8x384xf32>
    %61 = tpu.matmul %55, %0, %cst_22 {dimension_numbers = #tpu.dot_dimension_numbers<[1], [0], [0], [1], [0, 0, 1, 1], [], []>} : vector<8x128xf32>, vector<128x384xf32>, vector<8x384xf32> -> vector<8x384xf32>
    %62 = vector.extract_strided_slice %60 {offsets = [0, 0], sizes = [8, 256], strides = [1, 1]} : vector<8x384xf32> to vector<8x256xf32>
    %63 = vector.extract_strided_slice %61 {offsets = [0, 0], sizes = [8, 256], strides = [1, 1]} : vector<8x384xf32> to vector<8x256xf32>
    %64 = arith.addf %62, %63 : vector<8x256xf32>
    %65 = arith.negf %64 : vector<8x256xf32>
    %66 = math.exp %65 : vector<8x256xf32>
    %cst_23 = arith.constant 1.000000e+00 : f32
    %67 = vector.broadcast %cst_23 : f32 to vector<8x256xf32>
    %68 = arith.addf %67, %66 : vector<8x256xf32>
    %69 = arith.divf %67, %68 : vector<8x256xf32>
    %70 = vector.extract_strided_slice %69 {offsets = [0, 0], sizes = [8, 128], strides = [1, 1]} : vector<8x256xf32> to vector<8x128xf32>
    %71 = vector.extract_strided_slice %69 {offsets = [0, 128], sizes = [8, 128], strides = [1, 1]} : vector<8x256xf32> to vector<8x128xf32>
    %72 = vector.extract_strided_slice %60 {offsets = [0, 256], sizes = [8, 128], strides = [1, 1]} : vector<8x384xf32> to vector<8x128xf32>
    %73 = vector.extract_strided_slice %61 {offsets = [0, 256], sizes = [8, 128], strides = [1, 1]} : vector<8x384xf32> to vector<8x128xf32>
    %74 = arith.addf %73, %3 : vector<8x128xf32>
    %75 = arith.mulf %70, %74 : vector<8x128xf32>
    %76 = arith.addf %72, %75 : vector<8x128xf32>
    %77 = math.tanh %76 : vector<8x128xf32>
    %cst_24 = arith.constant 1.000000e+00 : f32
    %78 = vector.broadcast %cst_24 : f32 to vector<8x128xf32>
    %79 = arith.subf %78, %71 : vector<8x128xf32>
    %80 = arith.mulf %79, %77 : vector<8x128xf32>
    %81 = arith.mulf %71, %55 : vector<8x128xf32>
    %82 = arith.addf %80, %81 : vector<8x128xf32>
    %c2_25 = arith.constant 2 : index
    %c0_26 = arith.constant 0 : index
    %c0_27 = arith.constant 0 : index
    %83 = vector.load %arg7[%c2_25, %c0_26, %c0_27] : memref<8x8x128xf32, #tpu.memory_space<vmem>>, vector<1x8x128xf32>
    %84 = vector.shape_cast %83 : vector<1x8x128xf32> to vector<8x128xf32>
    %85 = vector.shape_cast %82 : vector<8x128xf32> to vector<1x8x128xf32>
    tpu.vector_store %arg7[%c2_25, %c0_26, %c0_27], %85 {strides = array<i32>} : memref<8x8x128xf32, #tpu.memory_space<vmem>>, vector<1x8x128xf32>,
    %c3 = arith.constant 3 : index
    %c0_28 = arith.constant 0 : index
    %c0_29 = arith.constant 0 : index
    %86 = vector.load %arg1[%c3, %c0_28, %c0_29] : memref<8x8x384xf32, #tpu.memory_space<vmem>>, vector<1x8x384xf32>
    %87 = vector.shape_cast %86 : vector<1x8x384xf32> to vector<8x384xf32>
    %cst_30 = arith.constant dense<0.000000e+00> : vector<8x384xf32>
    %88 = tpu.matmul %82, %0, %cst_30 {dimension_numbers = #tpu.dot_dimension_numbers<[1], [0], [0], [1], [0, 0, 1, 1], [], []>} : vector<8x128xf32>, vector<128x384xf32>, vector<8x384xf32> -> vector<8x384xf32>
    %89 = vector.extract_strided_slice %87 {offsets = [0, 0], sizes = [8, 256], strides = [1, 1]} : vector<8x384xf32> to vector<8x256xf32>
    %90 = vector.extract_strided_slice %88 {offsets = [0, 0], sizes = [8, 256], strides = [1, 1]} : vector<8x384xf32> to vector<8x256xf32>
    %91 = arith.addf %89, %90 : vector<8x256xf32>
    %92 = arith.negf %91 : vector<8x256xf32>
    %93 = math.exp %92 : vector<8x256xf32>
    %cst_31 = arith.constant 1.000000e+00 : f32
    %94 = vector.broadcast %cst_31 : f32 to vector<8x256xf32>
    %95 = arith.addf %94, %93 : vector<8x256xf32>
    %96 = arith.divf %94, %95 : vector<8x256xf32>
    %97 = vector.extract_strided_slice %96 {offsets = [0, 0], sizes = [8, 128], strides = [1, 1]} : vector<8x256xf32> to vector<8x128xf32>
    %98 = vector.extract_strided_slice %96 {offsets = [0, 128], sizes = [8, 128], strides = [1, 1]} : vector<8x256xf32> to vector<8x128xf32>
    %99 = vector.extract_strided_slice %87 {offsets = [0, 256], sizes = [8, 128], strides = [1, 1]} : vector<8x384xf32> to vector<8x128xf32>
    %100 = vector.extract_strided_slice %88 {offsets = [0, 256], sizes = [8, 128], strides = [1, 1]} : vector<8x384xf32> to vector<8x128xf32>
    %101 = arith.addf %100, %3 : vector<8x128xf32>
    %102 = arith.mulf %97, %101 : vector<8x128xf32>
    %103 = arith.addf %99, %102 : vector<8x128xf32>
    %104 = math.tanh %103 : vector<8x128xf32>
    %cst_32 = arith.constant 1.000000e+00 : f32
    %105 = vector.broadcast %cst_32 : f32 to vector<8x128xf32>
    %106 = arith.subf %105, %98 : vector<8x128xf32>
    %107 = arith.mulf %106, %104 : vector<8x128xf32>
    %108 = arith.mulf %98, %82 : vector<8x128xf32>
    %109 = arith.addf %107, %108 : vector<8x128xf32>
    %c3_33 = arith.constant 3 : index
    %c0_34 = arith.constant 0 : index
    %c0_35 = arith.constant 0 : index
    %110 = vector.load %arg7[%c3_33, %c0_34, %c0_35] : memref<8x8x128xf32, #tpu.memory_space<vmem>>, vector<1x8x128xf32>
    %111 = vector.shape_cast %110 : vector<1x8x128xf32> to vector<8x128xf32>
    %112 = vector.shape_cast %109 : vector<8x128xf32> to vector<1x8x128xf32>
    tpu.vector_store %arg7[%c3_33, %c0_34, %c0_35], %112 {strides = array<i32>} : memref<8x8x128xf32, #tpu.memory_space<vmem>>, vector<1x8x128xf32>,
    %c4 = arith.constant 4 : index
    %c0_36 = arith.constant 0 : index
    %c0_37 = arith.constant 0 : index
    %113 = vector.load %arg1[%c4, %c0_36, %c0_37] : memref<8x8x384xf32, #tpu.memory_space<vmem>>, vector<1x8x384xf32>
    %114 = vector.shape_cast %113 : vector<1x8x384xf32> to vector<8x384xf32>
    %cst_38 = arith.constant dense<0.000000e+00> : vector<8x384xf32>
    %115 = tpu.matmul %109, %0, %cst_38 {dimension_numbers = #tpu.dot_dimension_numbers<[1], [0], [0], [1], [0, 0, 1, 1], [], []>} : vector<8x128xf32>, vector<128x384xf32>, vector<8x384xf32> -> vector<8x384xf32>
    %116 = vector.extract_strided_slice %114 {offsets = [0, 0], sizes = [8, 256], strides = [1, 1]} : vector<8x384xf32> to vector<8x256xf32>
    %117 = vector.extract_strided_slice %115 {offsets = [0, 0], sizes = [8, 256], strides = [1, 1]} : vector<8x384xf32> to vector<8x256xf32>
    %118 = arith.addf %116, %117 : vector<8x256xf32>
    %119 = arith.negf %118 : vector<8x256xf32>
    %120 = math.exp %119 : vector<8x256xf32>
    %cst_39 = arith.constant 1.000000e+00 : f32
    %121 = vector.broadcast %cst_39 : f32 to vector<8x256xf32>
    %122 = arith.addf %121, %120 : vector<8x256xf32>
    %123 = arith.divf %121, %122 : vector<8x256xf32>
    %124 = vector.extract_strided_slice %123 {offsets = [0, 0], sizes = [8, 128], strides = [1, 1]} : vector<8x256xf32> to vector<8x128xf32>
    %125 = vector.extract_strided_slice %123 {offsets = [0, 128], sizes = [8, 128], strides = [1, 1]} : vector<8x256xf32> to vector<8x128xf32>
    %126 = vector.extract_strided_slice %114 {offsets = [0, 256], sizes = [8, 128], strides = [1, 1]} : vector<8x384xf32> to vector<8x128xf32>
    %127 = vector.extract_strided_slice %115 {offsets = [0, 256], sizes = [8, 128], strides = [1, 1]} : vector<8x384xf32> to vector<8x128xf32>
    %128 = arith.addf %127, %3 : vector<8x128xf32>
    %129 = arith.mulf %124, %128 : vector<8x128xf32>
    %130 = arith.addf %126, %129 : vector<8x128xf32>
    %131 = math.tanh %130 : vector<8x128xf32>
    %cst_40 = arith.constant 1.000000e+00 : f32
    %132 = vector.broadcast %cst_40 : f32 to vector<8x128xf32>
    %133 = arith.subf %132, %125 : vector<8x128xf32>
    %134 = arith.mulf %133, %131 : vector<8x128xf32>
    %135 = arith.mulf %125, %109 : vector<8x128xf32>
    %136 = arith.addf %134, %135 : vector<8x128xf32>
    %c4_41 = arith.constant 4 : index
    %c0_42 = arith.constant 0 : index
    %c0_43 = arith.constant 0 : index
    %137 = vector.load %arg7[%c4_41, %c0_42, %c0_43] : memref<8x8x128xf32, #tpu.memory_space<vmem>>, vector<1x8x128xf32>
    %138 = vector.shape_cast %137 : vector<1x8x128xf32> to vector<8x128xf32>
    %139 = vector.shape_cast %136 : vector<8x128xf32> to vector<1x8x128xf32>
    tpu.vector_store %arg7[%c4_41, %c0_42, %c0_43], %139 {strides = array<i32>} : memref<8x8x128xf32, #tpu.memory_space<vmem>>, vector<1x8x128xf32>,
    %c5 = arith.constant 5 : index
    %c0_44 = arith.constant 0 : index
    %c0_45 = arith.constant 0 : index
    %140 = vector.load %arg1[%c5, %c0_44, %c0_45] : memref<8x8x384xf32, #tpu.memory_space<vmem>>, vector<1x8x384xf32>
    %141 = vector.shape_cast %140 : vector<1x8x384xf32> to vector<8x384xf32>
    %cst_46 = arith.constant dense<0.000000e+00> : vector<8x384xf32>
    %142 = tpu.matmul %136, %0, %cst_46 {dimension_numbers = #tpu.dot_dimension_numbers<[1], [0], [0], [1], [0, 0, 1, 1], [], []>} : vector<8x128xf32>, vector<128x384xf32>, vector<8x384xf32> -> vector<8x384xf32>
    %143 = vector.extract_strided_slice %141 {offsets = [0, 0], sizes = [8, 256], strides = [1, 1]} : vector<8x384xf32> to vector<8x256xf32>
    %144 = vector.extract_strided_slice %142 {offsets = [0, 0], sizes = [8, 256], strides = [1, 1]} : vector<8x384xf32> to vector<8x256xf32>
    %145 = arith.addf %143, %144 : vector<8x256xf32>
    %146 = arith.negf %145 : vector<8x256xf32>
    %147 = math.exp %146 : vector<8x256xf32>
    %cst_47 = arith.constant 1.000000e+00 : f32
    %148 = vector.broadcast %cst_47 : f32 to vector<8x256xf32>
    %149 = arith.addf %148, %147 : vector<8x256xf32>
    %150 = arith.divf %148, %149 : vector<8x256xf32>
    %151 = vector.extract_strided_slice %150 {offsets = [0, 0], sizes = [8, 128], strides = [1, 1]} : vector<8x256xf32> to vector<8x128xf32>
    %152 = vector.extract_strided_slice %150 {offsets = [0, 128], sizes = [8, 128], strides = [1, 1]} : vector<8x256xf32> to vector<8x128xf32>
    %153 = vector.extract_strided_slice %141 {offsets = [0, 256], sizes = [8, 128], strides = [1, 1]} : vector<8x384xf32> to vector<8x128xf32>
    %154 = vector.extract_strided_slice %142 {offsets = [0, 256], sizes = [8, 128], strides = [1, 1]} : vector<8x384xf32> to vector<8x128xf32>
    %155 = arith.addf %154, %3 : vector<8x128xf32>
    %156 = arith.mulf %151, %155 : vector<8x128xf32>
    %157 = arith.addf %153, %156 : vector<8x128xf32>
    %158 = math.tanh %157 : vector<8x128xf32>
    %cst_48 = arith.constant 1.000000e+00 : f32
    %159 = vector.broadcast %cst_48 : f32 to vector<8x128xf32>
    %160 = arith.subf %159, %152 : vector<8x128xf32>
    %161 = arith.mulf %160, %158 : vector<8x128xf32>
    %162 = arith.mulf %152, %136 : vector<8x128xf32>
    %163 = arith.addf %161, %162 : vector<8x128xf32>
    %c5_49 = arith.constant 5 : index
    %c0_50 = arith.constant 0 : index
    %c0_51 = arith.constant 0 : index
    %164 = vector.load %arg7[%c5_49, %c0_50, %c0_51] : memref<8x8x128xf32, #tpu.memory_space<vmem>>, vector<1x8x128xf32>
    %165 = vector.shape_cast %164 : vector<1x8x128xf32> to vector<8x128xf32>
    %166 = vector.shape_cast %163 : vector<8x128xf32> to vector<1x8x128xf32>
    tpu.vector_store %arg7[%c5_49, %c0_50, %c0_51], %166 {strides = array<i32>} : memref<8x8x128xf32, #tpu.memory_space<vmem>>, vector<1x8x128xf32>,
    %c6 = arith.constant 6 : index
    %c0_52 = arith.constant 0 : index
    %c0_53 = arith.constant 0 : index
    %167 = vector.load %arg1[%c6, %c0_52, %c0_53] : memref<8x8x384xf32, #tpu.memory_space<vmem>>, vector<1x8x384xf32>
    %168 = vector.shape_cast %167 : vector<1x8x384xf32> to vector<8x384xf32>
    %cst_54 = arith.constant dense<0.000000e+00> : vector<8x384xf32>
    %169 = tpu.matmul %163, %0, %cst_54 {dimension_numbers = #tpu.dot_dimension_numbers<[1], [0], [0], [1], [0, 0, 1, 1], [], []>} : vector<8x128xf32>, vector<128x384xf32>, vector<8x384xf32> -> vector<8x384xf32>
    %170 = vector.extract_strided_slice %168 {offsets = [0, 0], sizes = [8, 256], strides = [1, 1]} : vector<8x384xf32> to vector<8x256xf32>
    %171 = vector.extract_strided_slice %169 {offsets = [0, 0], sizes = [8, 256], strides = [1, 1]} : vector<8x384xf32> to vector<8x256xf32>
    %172 = arith.addf %170, %171 : vector<8x256xf32>
    %173 = arith.negf %172 : vector<8x256xf32>
    %174 = math.exp %173 : vector<8x256xf32>
    %cst_55 = arith.constant 1.000000e+00 : f32
    %175 = vector.broadcast %cst_55 : f32 to vector<8x256xf32>
    %176 = arith.addf %175, %174 : vector<8x256xf32>
    %177 = arith.divf %175, %176 : vector<8x256xf32>
    %178 = vector.extract_strided_slice %177 {offsets = [0, 0], sizes = [8, 128], strides = [1, 1]} : vector<8x256xf32> to vector<8x128xf32>
    %179 = vector.extract_strided_slice %177 {offsets = [0, 128], sizes = [8, 128], strides = [1, 1]} : vector<8x256xf32> to vector<8x128xf32>
    %180 = vector.extract_strided_slice %168 {offsets = [0, 256], sizes = [8, 128], strides = [1, 1]} : vector<8x384xf32> to vector<8x128xf32>
    %181 = vector.extract_strided_slice %169 {offsets = [0, 256], sizes = [8, 128], strides = [1, 1]} : vector<8x384xf32> to vector<8x128xf32>
    %182 = arith.addf %181, %3 : vector<8x128xf32>
    %183 = arith.mulf %178, %182 : vector<8x128xf32>
    %184 = arith.addf %180, %183 : vector<8x128xf32>
    %185 = math.tanh %184 : vector<8x128xf32>
    %cst_56 = arith.constant 1.000000e+00 : f32
    %186 = vector.broadcast %cst_56 : f32 to vector<8x128xf32>
    %187 = arith.subf %186, %179 : vector<8x128xf32>
    %188 = arith.mulf %187, %185 : vector<8x128xf32>
    %189 = arith.mulf %179, %163 : vector<8x128xf32>
    %190 = arith.addf %188, %189 : vector<8x128xf32>
    %c6_57 = arith.constant 6 : index
    %c0_58 = arith.constant 0 : index
    %c0_59 = arith.constant 0 : index
    %191 = vector.load %arg7[%c6_57, %c0_58, %c0_59] : memref<8x8x128xf32, #tpu.memory_space<vmem>>, vector<1x8x128xf32>
    %192 = vector.shape_cast %191 : vector<1x8x128xf32> to vector<8x128xf32>
    %193 = vector.shape_cast %190 : vector<8x128xf32> to vector<1x8x128xf32>
    tpu.vector_store %arg7[%c6_57, %c0_58, %c0_59], %193 {strides = array<i32>} : memref<8x8x128xf32, #tpu.memory_space<vmem>>, vector<1x8x128xf32>,
    %c7 = arith.constant 7 : index
    %c0_60 = arith.constant 0 : index
    %c0_61 = arith.constant 0 : index
    %194 = vector.load %arg1[%c7, %c0_60, %c0_61] : memref<8x8x384xf32, #tpu.memory_space<vmem>>, vector<1x8x384xf32>
    %195 = vector.shape_cast %194 : vector<1x8x384xf32> to vector<8x384xf32>
    %cst_62 = arith.constant dense<0.000000e+00> : vector<8x384xf32>
    %196 = tpu.matmul %190, %0, %cst_62 {dimension_numbers = #tpu.dot_dimension_numbers<[1], [0], [0], [1], [0, 0, 1, 1], [], []>} : vector<8x128xf32>, vector<128x384xf32>, vector<8x384xf32> -> vector<8x384xf32>
    %197 = vector.extract_strided_slice %195 {offsets = [0, 0], sizes = [8, 256], strides = [1, 1]} : vector<8x384xf32> to vector<8x256xf32>
    %198 = vector.extract_strided_slice %196 {offsets = [0, 0], sizes = [8, 256], strides = [1, 1]} : vector<8x384xf32> to vector<8x256xf32>
    %199 = arith.addf %197, %198 : vector<8x256xf32>
    %200 = arith.negf %199 : vector<8x256xf32>
    %201 = math.exp %200 : vector<8x256xf32>
    %cst_63 = arith.constant 1.000000e+00 : f32
    %202 = vector.broadcast %cst_63 : f32 to vector<8x256xf32>
    %203 = arith.addf %202, %201 : vector<8x256xf32>
    %204 = arith.divf %202, %203 : vector<8x256xf32>
    %205 = vector.extract_strided_slice %204 {offsets = [0, 0], sizes = [8, 128], strides = [1, 1]} : vector<8x256xf32> to vector<8x128xf32>
    %206 = vector.extract_strided_slice %204 {offsets = [0, 128], sizes = [8, 128], strides = [1, 1]} : vector<8x256xf32> to vector<8x128xf32>
    %207 = vector.extract_strided_slice %195 {offsets = [0, 256], sizes = [8, 128], strides = [1, 1]} : vector<8x384xf32> to vector<8x128xf32>
    %208 = vector.extract_strided_slice %196 {offsets = [0, 256], sizes = [8, 128], strides = [1, 1]} : vector<8x384xf32> to vector<8x128xf32>
    %209 = arith.addf %208, %3 : vector<8x128xf32>
    %210 = arith.mulf %205, %209 : vector<8x128xf32>
    %211 = arith.addf %207, %210 : vector<8x128xf32>
    %212 = math.tanh %211 : vector<8x128xf32>
    %cst_64 = arith.constant 1.000000e+00 : f32
    %213 = vector.broadcast %cst_64 : f32 to vector<8x128xf32>
    %214 = arith.subf %213, %206 : vector<8x128xf32>
    %215 = arith.mulf %214, %212 : vector<8x128xf32>
    %216 = arith.mulf %206, %190 : vector<8x128xf32>
    %217 = arith.addf %215, %216 : vector<8x128xf32>
    %c7_65 = arith.constant 7 : index
    %c0_66 = arith.constant 0 : index
    %c0_67 = arith.constant 0 : index
    %218 = vector.load %arg7[%c7_65, %c0_66, %c0_67] : memref<8x8x128xf32, #tpu.memory_space<vmem>>, vector<1x8x128xf32>
    %219 = vector.shape_cast %218 : vector<1x8x128xf32> to vector<8x128xf32>
    %220 = vector.shape_cast %217 : vector<8x128xf32> to vector<1x8x128xf32>
    tpu.vector_store %arg7[%c7_65, %c0_66, %c0_67], %220 {strides = array<i32>} : memref<8x8x128xf32, #tpu.memory_space<vmem>>, vector<1x8x128xf32>,
    %c0_68 = arith.constant 0 : index
    %c0_69 = arith.constant 0 : index
    %c0_70 = arith.constant 0 : index
    %221 = vector.load %arg7[%c0_68, %c0_69, %c0_70] : memref<8x8x128xf32, #tpu.memory_space<vmem>>, vector<8x8x128xf32>
    %222 = vector.shape_cast %221 : vector<8x8x128xf32> to vector<64x128xf32>
    %c0_71 = arith.constant 0 : index
    %c0_72 = arith.constant 0 : index
    %223 = vector.load %arg4[%c0_71, %c0_72] : memref<128x128xf32, #tpu.memory_space<vmem>>, vector<128x128xf32>
    %cst_73 = arith.constant dense<0.000000e+00> : vector<64x128xf32>
    %224 = tpu.matmul %222, %223, %cst_73 {dimension_numbers = #tpu.dot_dimension_numbers<[1], [0], [0], [1], [0, 0, 1, 1], [], []>} : vector<64x128xf32>, vector<128x128xf32>, vector<64x128xf32> -> vector<64x128xf32>
    %c0_74 = arith.constant 0 : index
    %c0_75 = arith.constant 0 : index
    %225 = vector.load %arg5[%c0_74, %c0_75] : memref<1x128xf32, #tpu.memory_space<vmem>>, vector<1x128xf32>
    %226 = vector.broadcast %225 : vector<1x128xf32> to vector<64x128xf32>
    %227 = arith.addf %224, %226 : vector<64x128xf32>
    %c0_76 = arith.constant 0 : index
    %c0_77 = arith.constant 0 : index
    %228 = vector.load %arg6[%c0_76, %c0_77] : memref<64x128xf32, #tpu.memory_space<vmem>>, vector<64x128xf32>
    tpu.vector_store %arg6[%c0_76, %c0_77], %227 {strides = array<i32>} : memref<64x128xf32, #tpu.memory_space<vmem>>, vector<64x128xf32>,
    return
  }
  func.func @transform_0(%arg0: i32) -> (i32, i32, i32) {
    %c0_i32 = arith.constant 0 : i32
    %c0_i32_0 = arith.constant 0 : i32
    %c0_i32_1 = arith.constant 0 : i32
    %c0_i32_2 = arith.constant 0 : i32
    return %c0_i32, %c0_i32_0, %c0_i32_1 : i32, i32, i32
  }
  func.func @transform_1(%arg0: i32) -> (i32, i32) {
    %c0_i32 = arith.constant 0 : i32
    %c0_i32_0 = arith.constant 0 : i32
    %c0_i32_1 = arith.constant 0 : i32
    return %c0_i32, %c0_i32_0 : i32, i32
  }
  func.func @transform_2(%arg0: i32) -> (i32, i32) {
    %c0_i32 = arith.constant 0 : i32
    %c0_i32_0 = arith.constant 0 : i32
    %c0_i32_1 = arith.constant 0 : i32
    return %c0_i32, %c0_i32_0 : i32, i32
  }
  func.func @transform_3(%arg0: i32) -> (i32, i32) {
    %c0_i32 = arith.constant 0 : i32
    %c0_i32_0 = arith.constant 0 : i32
    %c0_i32_1 = arith.constant 0 : i32
    return %c0_i32, %c0_i32_0 : i32, i32
  }
  func.func @transform_4(%arg0: i32) -> (i32, i32) {
    %c0_i32 = arith.constant 0 : i32
    %c0_i32_0 = arith.constant 0 : i32
    %c0_i32_1 = arith.constant 0 : i32
    return %c0_i32, %c0_i32_0 : i32, i32
  }
  func.func @transform_5(%arg0: i32) -> (i32, i32) {
    %c0_i32 = arith.constant 0 : i32
    %c0_i32_0 = arith.constant 0 : i32
    %c0_i32_1 = arith.constant 0 : i32
    return %c0_i32, %c0_i32_0 : i32, i32
  }
}

</mosaic_0001>

<llo_original>
// kernel: tpu_custom_call.1
$region0: #{tpu_custom_call.1}
  #allocation0 [shape = 'u32[]', space=smem, size = 0x4, offset = 0x4, fixed_abs, tag = 'smem constant byte address 0x4 - core index']
  #allocation1 [shape = 'u32[144,128]{1,0:T(1,128)}', space=vmem, size = 0x12000, scoped, tag = 'internal scratch']
  #allocation2 [shape = 'f32[8,8,128]{2,1,0:T(8,128)}', space=vmem, size = 0x8000, scoped, tag = 'scratch operand']
  %s0 = inlined_call_operand.hbm [shape: f32[8,8,384], index: 0, kind: input, shape index: {}]
  %s1 = inlined_call_operand.hbm [shape: f32[128,384], index: 1, kind: input, shape index: {}]
  %s2 = inlined_call_operand.vmem [shape: f32[1,128], index: 2, kind: input, shape index: {}]
  %s3 = inlined_call_operand.hbm [shape: f32[128,128], index: 3, kind: input, shape index: {}]
  %s4 = inlined_call_operand.vmem [shape: f32[1,128], index: 4, kind: input, shape index: {}]
  %s5 = inlined_call_operand.hbm [shape: f32[64,128], index: 5, kind: output, shape index: {}]
  %s6 = sld [smem:[#allocation0]]
  $region42: #{tpu_custom_call.1} parent=0
    _
  %s8 = ssub.s32 1, %s6
  %s9 = scalar_select 0, %s8, %s6
  $region1: #{tpu_custom_call.1} parent=0
    #allocation3 [shape = 'u8[98304]{0}', space=vmem, size = 0x18000, scoped, tag = 'input window, operand 0, single buffered']
    #allocation4 [shape = 's32[1]{0}', space=sflag, size = 0x4, scoped, tag = 'scoped memory for tpu_custom_call.1']
    #allocation5 [shape = 's32[1]{0}', space=sflag, size = 0x4, scoped, tag = 'scoped memory for tpu_custom_call.1']
    #allocation6 [shape = 'u8[196608]{0}', space=vmem, size = 0x30000, scoped, tag = 'input window, operand 1, single buffered']
    #allocation7 [shape = 's32[1]{0}', space=sflag, size = 0x4, scoped, tag = 'scoped memory for tpu_custom_call.1']
    #allocation8 [shape = 'u8[65536]{0}', space=vmem, size = 0x10000, scoped, tag = 'input window, operand 3, single buffered']
    #allocation9 [shape = 'u8[32768]{0}', space=vmem, size = 0x8000, scoped, tag = 'output window, operand 0, single buffered']
    %10 = vsyncpa [#allocation4], 0
    %11 = vsyncpa [#allocation7], 0
    %12 = vsyncpa [#allocation5], 0
    // Predicated region
    $region2: #{tpu_custom_call.1} parent=1 // pred_check
      _
    $region3: #{tpu_custom_call.1} parent=1 // pred_check_branch
      %14 = sbr.rel (0) target = $region5
    $region4: #{tpu_custom_call.1} parent=1 // pred_region
      %s16 = ssub.s32 3072, 3072
      %17 = vsyncadd [#allocation4], %s16
      %s18 = sshll.u32 [#allocation3], 4
      %s19 = int_to_ptr.vmem [resolvable:$true] %s18
      %24 = dma.hbm_to_vmem [thread:$0]  %s0, 3072, %s19, [#allocation4], 384, 384, 24
    $region5: #{tpu_custom_call.1} parent=1 // pred_fallthru
      _
    // Predicated region
    $region6: #{tpu_custom_call.1} parent=1 // pred_check
      _
    $region7: #{tpu_custom_call.1} parent=1 // pred_check_branch
      %26 = sbr.rel (0) target = $region9
    $region8: #{tpu_custom_call.1} parent=1 // pred_region
      %s28 = ssub.s32 6144, 6144
      %29 = vsyncadd [#allocation7], %s28
      %s30 = sshll.u32 [#allocation6], 4
      %s31 = int_to_ptr.vmem [resolvable:$true] %s30
      %36 = dma.hbm_to_vmem [thread:$0]  %s1, 6144, %s31, [#allocation7], 384, 384, 24
    $region9: #{tpu_custom_call.1} parent=1 // pred_fallthru
      _
    // Predicated region
    $region10: #{tpu_custom_call.1} parent=1 // pred_check
      _
    $region11: #{tpu_custom_call.1} parent=1 // pred_check_branch
      %38 = sbr.rel (0) target = $region13
    $region12: #{tpu_custom_call.1} parent=1 // pred_region
      _
    $region13: #{tpu_custom_call.1} parent=1 // pred_fallthru
      _
    // Predicated region
    $region14: #{tpu_custom_call.1} parent=1 // pred_check
      _
    $region15: #{tpu_custom_call.1} parent=1 // pred_check_branch
      %40 = sbr.rel (0) target = $region17
    $region16: #{tpu_custom_call.1} parent=1 // pred_region
      %s42 = ssub.s32 2048, 2048
      %43 = vsyncadd [#allocation7], %s42
      %s44 = sshll.u32 [#allocation8], 4
      %s45 = int_to_ptr.vmem [resolvable:$true] %s44
      %50 = dma.hbm_to_vmem [thread:$0]  %s3, 2048, %s45, [#allocation7], 128, 128, 8
    $region17: #{tpu_custom_call.1} parent=1 // pred_fallthru
      _
    // Predicated region
    $region18: #{tpu_custom_call.1} parent=1 // pred_check
      _
    $region19: #{tpu_custom_call.1} parent=1 // pred_check_branch
      %52 = sbr.rel (0) target = $region21
    $region20: #{tpu_custom_call.1} parent=1 // pred_region
      _
    $region21: #{tpu_custom_call.1} parent=1 // pred_fallthru
      _
    // Predicated region
    $region22: #{tpu_custom_call.1} parent=1 // pred_check
      _
    $region23: #{tpu_custom_call.1} parent=1 // pred_check_branch
      %54 = sbr.rel (0) target = $region25
    $region24: #{tpu_custom_call.1} parent=1 // pred_region
      %55 = dma.done [#allocation4], 3072
    $region25: #{tpu_custom_call.1} parent=1 // pred_fallthru
      _
    // Predicated region
    $region26: #{tpu_custom_call.1} parent=1 // pred_check
      _
    $region27: #{tpu_custom_call.1} parent=1 // pred_check_branch
      %57 = sbr.rel (0) target = $region29
    $region28: #{tpu_custom_call.1} parent=1 // pred_region
      %58 = dma.done [#allocation7], 6144
    $region29: #{tpu_custom_call.1} parent=1 // pred_fallthru
      _
    // Predicated region
    $region30: #{tpu_custom_call.1} parent=1 // pred_check
      _
    $region31: #{tpu_custom_call.1} parent=1 // pred_check_branch
      %60 = sbr.rel (0) target = $region33
    $region32: #{tpu_custom_call.1} parent=1 // pred_region
      %61 = dma.done [#allocation7], 2048
    $region33: #{tpu_custom_call.1} parent=1 // pred_fallthru
      _
    %v62 = vld [vmem:[#allocation6] sm:$0xff]
    %v63 = vld [vmem:[#allocation6 + $0x8] sm:$0xff]
    %v64 = vld [vmem:[#allocation6 + $0x10] sm:$0xff]
    %v65 = vld [vmem:[#allocation6 + $0x18] sm:$0xff]
    %v66 = vld [vmem:[#allocation6 + $0x20] sm:$0xff]
    %v67 = vld [vmem:[#allocation6 + $0x28] sm:$0xff]
    %v68 = vld [vmem:[#allocation6 + $0x30] sm:$0xff]
    %v69 = vld [vmem:[#allocation6 + $0x38] sm:$0xff]
    %v70 = vld [vmem:[#allocation6 + $0x40] sm:$0xff]
    %v71 = vld [vmem:[#allocation6 + $0x48] sm:$0xff]
    %v72 = vld [vmem:[#allocation6 + $0x50] sm:$0xff]
    %v73 = vld [vmem:[#allocation6 + $0x58] sm:$0xff]
    %v74 = vld [vmem:[#allocation6 + $0x60] sm:$0xff]
    %v75 = vld [vmem:[#allocation6 + $0x68] sm:$0xff]
    %v76 = vld [vmem:[#allocation6 + $0x70] sm:$0xff]
    %v77 = vld [vmem:[#allocation6 + $0x78] sm:$0xff]
    %v78 = vld [vmem:[#allocation6 + $0x80] sm:$0xff]
    %v79 = vld [vmem:[#allocation6 + $0x88] sm:$0xff]
    %v80 = vld [vmem:[#allocation6 + $0x90] sm:$0xff]
    %v81 = vld [vmem:[#allocation6 + $0x98] sm:$0xff]
    %v82 = vld [vmem:[#allocation6 + $0xa0] sm:$0xff]
    %v83 = vld [vmem:[#allocation6 + $0xa8] sm:$0xff]
    %v84 = vld [vmem:[#allocation6 + $0xb0] sm:$0xff]
    %v85 = vld [vmem:[#allocation6 + $0xb8] sm:$0xff]
    %v86 = vld [vmem:[#allocation6 + $0xc0] sm:$0xff]
    %v87 = vld [vmem:[#allocation6 + $0xc8] sm:$0xff]
    %v88 = vld [vmem:[#allocation6 + $0xd0] sm:$0xff]
    %v89 = vld [vmem:[#allocation6 + $0xd8] sm:$0xff]
    %v90 = vld [vmem:[#allocation6 + $0xe0] sm:$0xff]
    %v91 = vld [vmem:[#allocation6 + $0xe8] sm:$0xff]
    %v92 = vld [vmem:[#allocation6 + $0xf0] sm:$0xff]
    %v93 = vld [vmem:[#allocation6 + $0xf8] sm:$0xff]
    %v94 = vld [vmem:[#allocation6 + $0x100] sm:$0xff]
    %v95 = vld [vmem:[#allocation6 + $0x108] sm:$0xff]
    %v96 = vld [vmem:[#allocation6 + $0x110] sm:$0xff]
    %v97 = vld [vmem:[#allocation6 + $0x118] sm:$0xff]
    %v98 = vld [vmem:[#allocation6 + $0x120] sm:$0xff]
    %v99 = vld [vmem:[#allocation6 + $0x128] sm:$0xff]
    %v100 = vld [vmem:[#allocation6 + $0x130] sm:$0xff]
    %v101 = vld [vmem:[#allocation6 + $0x138] sm:$0xff]
    %v102 = vld [vmem:[#allocation6 + $0x140] sm:$0xff]
    %v103 = vld [vmem:[#allocation6 + $0x148] sm:$0xff]
    %v104 = vld [vmem:[#allocation6 + $0x150] sm:$0xff]
    %v105 = vld [vmem:[#allocation6 + $0x158] sm:$0xff]
    %v106 = vld [vmem:[#allocation6 + $0x160] sm:$0xff]
    %v107 = vld [vmem:[#allocation6 + $0x168] sm:$0xff]
    %v108 = vld [vmem:[#allocation6 + $0x170] sm:$0xff]
    %v109 = vld [vmem:[#allocation6 + $0x178] sm:$0xff]
    %v110 = vld [vmem:[%s2] sm:$0x1]
    %v112 = vlaneseq
    %v113 = vshrl.u32 %v112, 7
    %v114 = vsub.s32 0, %v113
    %v115 = vrot.slane %v110, %v114
    %v117 = vld [vmem:[#allocation3] sm:$0xff]
    %v118 = vld [vmem:[#allocation3 + $0x8] sm:$0xff]
    %v119 = vld [vmem:[#allocation3 + $0x10] sm:$0xff]
    %120 = vmatprep.subr.mxu0 %v63
    %121 = vmatpush1.msra.mxu0 %v62
    %122 = vmatprep.subr.mxu0 %v66
    %123 = vmatpush1.msra.mxu0 %v65
    %124 = vmatprep.subr.mxu0 %v69
    %125 = vmatpush1.msra.mxu0 %v68
    %126 = vmatprep.subr.mxu0 %v72
    %127 = vmatpush1.msra.mxu0 %v71
    %128 = vmatprep.subr.mxu0 %v75
    %129 = vmatpush1.msra.mxu0 %v74
    %130 = vmatprep.subr.mxu0 %v78
    %131 = vmatpush1.msra.mxu0 %v77
    %132 = vmatprep.subr.mxu0 %v81
    %133 = vmatpush1.msra.mxu0 %v80
    %134 = vmatprep.subr.mxu0 %v84
    %135 = vmatpush1.msra.mxu0 %v83
    %136 = vmatprep.subr.mxu0 %v87
    %137 = vmatpush1.msra.mxu0 %v86
    %138 = vmatprep.subr.mxu0 %v90
    %139 = vmatpush1.msra.mxu0 %v89
    %140 = vmatprep.subr.mxu0 %v93
    %141 = vmatpush1.msra.mxu0 %v92
    %142 = vmatprep.subr.mxu0 %v96
    %143 = vmatpush1.msra.mxu0 %v95
    %144 = vmatprep.subr.mxu0 %v99
    %145 = vmatpush1.msra.mxu0 %v98
    %146 = vmatprep.subr.mxu0 %v102
    %147 = vmatpush1.msra.mxu0 %v101
    %148 = vmatprep.subr.mxu0 %v105
    %149 = vmatpush1.msra.mxu0 %v104
    %150 = vmatprep.subr.mxu0 %v108
    %151 = vmatpush1.msra.mxu0 %v107
    %152 = vmatprep.subr.mxu0 0.0
    %153 = vmatpush1.msra.mxu0 0.0
    %154 = vmatprep.subr.mxu0 0.0
    %155 = vmatpush1.msra.mxu0 0.0
    %156 = vmatprep.subr.mxu0 0.0
    %157 = vmatpush1.msra.mxu0 0.0
    %158 = vmatprep.subr.mxu0 0.0
    %159 = vmatpush1.msra.mxu0 0.0
    %160 = vmatprep.subr.mxu0 0.0
    %161 = vmatpush1.msra.mxu0 0.0
    %162 = vmatprep.subr.mxu0 0.0
    %163 = vmatpush1.msra.mxu0 0.0
    %164 = vmatprep.subr.mxu0 0.0
    %165 = vmatpush1.msra.mxu0 0.0
    %166 = vmatprep.subr.mxu0 0.0
    %167 = vmatpush1.msra.mxu0 0.0
    %168 = vmatprep.subr.mxu0 0.0
    %169 = vmatpush1.msra.mxu0 0.0
    %170 = vmatprep.subr.mxu0 0.0
    %171 = vmatpush1.msra.mxu0 0.0
    %172 = vmatprep.subr.mxu0 0.0
    %173 = vmatpush1.msra.mxu0 0.0
    %174 = vmatprep.subr.mxu0 0.0
    %175 = vmatpush1.msra.mxu0 0.0
    %176 = vmatprep.subr.mxu0 0.0
    %177 = vmatpush1.msra.mxu0 0.0
    %178 = vmatprep.subr.mxu0 0.0
    %179 = vmatpush1.msra.mxu0 0.0
    %180 = vmatprep.subr.mxu0 0.0
    %181 = vmatpush1.msra.mxu0 0.0
    %182 = vmatprep.subr.mxu0 0.0
    %183 = vmatpush1.msra.mxu0 0.0
    %184 = vmatprep.mubr.f32.mxu0 0.0
    %185 = vmatmul.mubr.f32.gmra.mrb[0].mxu0 0.0
    %v186 = vpop.f32.mrb[0].mxu0
    %v187 = vadd.f32 0.0, %v186
    %v188 = vpop.f32.mrb[0].mxu0
    %v189 = vadd.f32 0.0, %v188
    %190 = vdwg.mxu0
    %191 = vmatprep.subr.mxu0 0.0
    %192 = vmatpush1.msra.mxu0 %v64
    %193 = vmatprep.subr.mxu0 0.0
    %194 = vmatpush1.msra.mxu0 %v67
    %195 = vmatprep.subr.mxu0 0.0
    %196 = vmatpush1.msra.mxu0 %v70
    %197 = vmatprep.subr.mxu0 0.0
    %198 = vmatpush1.msra.mxu0 %v73
    %199 = vmatprep.subr.mxu0 0.0
    %200 = vmatpush1.msra.mxu0 %v76
    %201 = vmatprep.subr.mxu0 0.0
    %202 = vmatpush1.msra.mxu0 %v79
    %203 = vmatprep.subr.mxu0 0.0
    %204 = vmatpush1.msra.mxu0 %v82
    %205 = vmatprep.subr.mxu0 0.0
    %206 = vmatpush1.msra.mxu0 %v85
    %207 = vmatprep.subr.mxu0 0.0
    %208 = vmatpush1.msra.mxu0 %v88
    %209 = vmatprep.subr.mxu0 0.0
    %210 = vmatpush1.msra.mxu0 %v91
    %211 = vmatprep.subr.mxu0 0.0
    %212 = vmatpush1.msra.mxu0 %v94
    %213 = vmatprep.subr.mxu0 0.0
    %214 = vmatpush1.msra.mxu0 %v97
    %215 = vmatprep.subr.mxu0 0.0
    %216 = vmatpush1.msra.mxu0 %v100
    %217 = vmatprep.subr.mxu0 0.0
    %218 = vmatpush1.msra.mxu0 %v103
    %219 = vmatprep.subr.mxu0 0.0
    %220 = vmatpush1.msra.mxu0 %v106
    %221 = vmatprep.subr.mxu0 0.0
    %222 = vmatpush1.msra.mxu0 %v109
    %223 = vmatprep.subr.mxu0 0.0
    %224 = vmatpush1.msra.mxu0 0.0
    %225 = vmatprep.subr.mxu0 0.0
    %226 = vmatpush1.msra.mxu0 0.0
    %227 = vmatprep.subr.mxu0 0.0
    %228 = vmatpush1.msra.mxu0 0.0
    %229 = vmatprep.subr.mxu0 0.0
    %230 = vmatpush1.msra.mxu0 0.0
    %231 = vmatprep.subr.mxu0 0.0
    %232 = vmatpush1.msra.mxu0 0.0
    %233 = vmatprep.subr.mxu0 0.0
    %234 = vmatpush1.msra.mxu0 0.0
    %235 = vmatprep.subr.mxu0 0.0
    %236 = vmatpush1.msra.mxu0 0.0
    %237 = vmatprep.subr.mxu0 0.0
    %238 = vmatpush1.msra.mxu0 0.0
    %239 = vmatprep.subr.mxu0 0.0
    %240 = vmatpush1.msra.mxu0 0.0
    %241 = vmatprep.subr.mxu0 0.0
    %242 = vmatpush1.msra.mxu0 0.0
    %243 = vmatprep.subr.mxu0 0.0
    %244 = vmatpush1.msra.mxu0 0.0
    %245 = vmatprep.subr.mxu0 0.0
    %246 = vmatpush1.msra.mxu0 0.0
    %247 = vmatprep.subr.mxu0 0.0
    %248 = vmatpush1.msra.mxu0 0.0
    %249 = vmatprep.subr.mxu0 0.0
    %250 = vmatpush1.msra.mxu0 0.0
    %251 = vmatprep.subr.mxu0 0.0
    %252 = vmatpush1.msra.mxu0 0.0
    %253 = vmatprep.subr.mxu0 0.0
    %254 = vmatpush1.msra.mxu0 0.0
    %255 = vmatprep.mubr.f32.mxu0 0.0
    %256 = vmatmul.mubr.f32.gmra.mrb[0].mxu0 0.0
    %v257 = vpop.f32.mrb[0].mxu0
    %v258 = vadd.f32 0.0, %v257
    %v259 = vpop.f32.mrb[0].mxu0
    %260 = vdwg.mxu0
    %v261 = vadd.f32 %v117, %v187
    %v262 = vadd.f32 %v118, %v189
    %v263 = vxor.u32 %v261, 2147483648
    %v264 = vxor.u32 %v262, 2147483648
    %v265 = vmul.f32 %v263, 1.442695
    %v266 = vpow.pop %v265
    %v267 = vmul.f32 %v264, 1.442695
    %v268 = vpow.pop %v267
    %v269 = vadd.f32 %v266, 1.0
    %v270 = vadd.f32 %v268, 1.0
    %v271 = vrcp.pop %v269
    %v272 = vmul.f32 1.0, %v271
    %v273 = vrcp.pop %v270
    %v274 = vmul.f32 1.0, %v273
    %v275 = vadd.f32 %v258, %v115
    %v276 = vmul.f32 %v272, %v275
    %v277 = vadd.f32 %v119, %v276
    %v278 = vtanh.pop %v277
    %v279 = vsub.f32 1.0, %v274
    %v280 = vmul.f32 %v279, %v278
    %v281 = vmul.f32 %v274, 0.0
    %v282 = vadd.f32 %v280, %v281
    %283 = vst [vmem:[#allocation2] sm:$0xff] %v282
    %s284 = scalar_lea.vmem [#allocation3], 24
    %v285 = vld [vmem:[%s284] sm:$0xff]
    %v286 = vld [vmem:[%s284 + $0x8] sm:$0xff]
    %v287 = vld [vmem:[%s284 + $0x10] sm:$0xff]
    %288 = vmatprep.subr.mxu0 %v63
    %289 = vmatpush1.msra.mxu0 %v62
    %290 = vmatprep.subr.mxu0 %v66
    %291 = vmatpush1.msra.mxu0 %v65
    %292 = vmatprep.subr.mxu0 %v69
    %293 = vmatpush1.msra.mxu0 %v68
    %294 = vmatprep.subr.mxu0 %v72
    %295 = vmatpush1.msra.mxu0 %v71
    %296 = vmatprep.subr.mxu0 %v75
    %297 = vmatpush1.msra.mxu0 %v74
    %298 = vmatprep.subr.mxu0 %v78
    %299 = vmatpush1.msra.mxu0 %v77
    %300 = vmatprep.subr.mxu0 %v81
    %301 = vmatpush1.msra.mxu0 %v80
    %302 = vmatprep.subr.mxu0 %v84
    %303 = vmatpush1.msra.mxu0 %v83
    %304 = vmatprep.subr.mxu0 %v87
    %305 = vmatpush1.msra.mxu0 %v86
    %306 = vmatprep.subr.mxu0 %v90
    %307 = vmatpush1.msra.mxu0 %v89
    %308 = vmatprep.subr.mxu0 %v93
    %309 = vmatpush1.msra.mxu0 %v92
    %310 = vmatprep.subr.mxu0 %v96
    %311 = vmatpush1.msra.mxu0 %v95
    %312 = vmatprep.subr.mxu0 %v99
    %313 = vmatpush1.msra.mxu0 %v98
    %314 = vmatprep.subr.mxu0 %v102
    %315 = vmatpush1.msra.mxu0 %v101
    %316 = vmatprep.subr.mxu0 %v105
    %317 = vmatpush1.msra.mxu0 %v104
    %318 = vmatprep.subr.mxu0 %v108
    %319 = vmatpush1.msra.mxu0 %v107
    %320 = vmatprep.subr.mxu0 0.0
    %321 = vmatpush1.msra.mxu0 0.0
    %322 = vmatprep.subr.mxu0 0.0
    %323 = vmatpush1.msra.mxu0 0.0
    %324 = vmatprep.subr.mxu0 0.0
    %325 = vmatpush1.msra.mxu0 0.0
    %326 = vmatprep.subr.mxu0 0.0
    %327 = vmatpush1.msra.mxu0 0.0
    %328 = vmatprep.subr.mxu0 0.0
    %329 = vmatpush1.msra.mxu0 0.0
    %330 = vmatprep.subr.mxu0 0.0
    %331 = vmatpush1.msra.mxu0 0.0
    %332 = vmatprep.subr.mxu0 0.0
    %333 = vmatpush1.msra.mxu0 0.0
    %334 = vmatprep.subr.mxu0 0.0
    %335 = vmatpush1.msra.mxu0 0.0
    %336 = vmatprep.subr.mxu0 0.0
    %337 = vmatpush1.msra.mxu0 0.0
    %338 = vmatprep.subr.mxu0 0.0
    %339 = vmatpush1.msra.mxu0 0.0
    %340 = vmatprep.subr.mxu0 0.0
    %341 = vmatpush1.msra.mxu0 0.0
    %342 = vmatprep.subr.mxu0 0.0
    %343 = vmatpush1.msra.mxu0 0.0
    %344 = vmatprep.subr.mxu0 0.0
    %345 = vmatpush1.msra.mxu0 0.0
    %346 = vmatprep.subr.mxu0 0.0
    %347 = vmatpush1.msra.mxu0 0.0
    %348 = vmatprep.subr.mxu0 0.0
    %349 = vmatpush1.msra.mxu0 0.0
    %350 = vmatprep.subr.mxu0 0.0
    %351 = vmatpush1.msra.mxu0 0.0
    %352 = vmatprep.mubr.f32.mxu0 0.0
    %353 = vmatmul.mubr.f32.gmra.mrb[0].mxu0 %v282
    %v354 = vpop.f32.mrb[0].mxu0
    %v355 = vadd.f32 0.0, %v354
    %v356 = vpop.f32.mrb[0].mxu0
    %v357 = vadd.f32 0.0, %v356
    %358 = vdwg.mxu0
    %359 = vmatprep.subr.mxu0 0.0
    %360 = vmatpush1.msra.mxu0 %v64
    %361 = vmatprep.subr.mxu0 0.0
    %362 = vmatpush1.msra.mxu0 %v67
    %363 = vmatprep.subr.mxu0 0.0
    %364 = vmatpush1.msra.mxu0 %v70
    %365 = vmatprep.subr.mxu0 0.0
    %366 = vmatpush1.msra.mxu0 %v73
    %367 = vmatprep.subr.mxu0 0.0
    %368 = vmatpush1.msra.mxu0 %v76
    %369 = vmatprep.subr.mxu0 0.0
    %370 = vmatpush1.msra.mxu0 %v79
    %371 = vmatprep.subr.mxu0 0.0
    %372 = vmatpush1.msra.mxu0 %v82
    %373 = vmatprep.subr.mxu0 0.0
    %374 = vmatpush1.msra.mxu0 %v85
    %375 = vmatprep.subr.mxu0 0.0
    %376 = vmatpush1.msra.mxu0 %v88
    %377 = vmatprep.subr.mxu0 0.0
    %378 = vmatpush1.msra.mxu0 %v91
    %379 = vmatprep.subr.mxu0 0.0
    %380 = vmatpush1.msra.mxu0 %v94
    %381 = vmatprep.subr.mxu0 0.0
    %382 = vmatpush1.msra.mxu0 %v97
    %383 = vmatprep.subr.mxu0 0.0
    %384 = vmatpush1.msra.mxu0 %v100
    %385 = vmatprep.subr.mxu0 0.0
    %386 = vmatpush1.msra.mxu0 %v103
    %387 = vmatprep.subr.mxu0 0.0
    %388 = vmatpush1.msra.mxu0 %v106
    %389 = vmatprep.subr.mxu0 0.0
    %390 = vmatpush1.msra.mxu0 %v109
    %391 = vmatprep.subr.mxu0 0.0
    %392 = vmatpush1.msra.mxu0 0.0
    %393 = vmatprep.subr.mxu0 0.0
    %394 = vmatpush1.msra.mxu0 0.0
    %395 = vmatprep.subr.mxu0 0.0
    %396 = vmatpush1.msra.mxu0 0.0
    %397 = vmatprep.subr.mxu0 0.0
    %398 = vmatpush1.msra.mxu0 0.0
    %399 = vmatprep.subr.mxu0 0.0
    %400 = vmatpush1.msra.mxu0 0.0
    %401 = vmatprep.subr.mxu0 0.0
    %402 = vmatpush1.msra.mxu0 0.0
    %403 = vmatprep.subr.mxu0 0.0
    %404 = vmatpush1.msra.mxu0 0.0
    %405 = vmatprep.subr.mxu0 0.0
    %406 = vmatpush1.msra.mxu0 0.0
    %407 = vmatprep.subr.mxu0 0.0
    %408 = vmatpush1.msra.mxu0 0.0
    %409 = vmatprep.subr.mxu0 0.0
    %410 = vmatpush1.msra.mxu0 0.0
    %411 = vmatprep.subr.mxu0 0.0
    %412 = vmatpush1.msra.mxu0 0.0
    %413 = vmatprep.subr.mxu0 0.0
    %414 = vmatpush1.msra.mxu0 0.0
    %415 = vmatprep.subr.mxu0 0.0
    %416 = vmatpush1.msra.mxu0 0.0
    %417 = vmatprep.subr.mxu0 0.0
    %418 = vmatpush1.msra.mxu0 0.0
    %419 = vmatprep.subr.mxu0 0.0
    %420 = vmatpush1.msra.mxu0 0.0
    %421 = vmatprep.subr.mxu0 0.0
    %422 = vmatpush1.msra.mxu0 0.0
    %423 = vmatprep.mubr.f32.mxu0 0.0
    %424 = vmatmul.mubr.f32.gmra.mrb[0].mxu0 %v282
    %v425 = vpop.f32.mrb[0].mxu0
    %v426 = vadd.f32 0.0, %v425
    %v427 = vpop.f32.mrb[0].mxu0
    %428 = vdwg.mxu0
    %v429 = vadd.f32 %v285, %v355
    %v430 = vadd.f32 %v286, %v357
    %v431 = vxor.u32 %v429, 2147483648
    %v432 = vxor.u32 %v430, 2147483648
    %v433 = vmul.f32 %v431, 1.442695
    %v434 = vpow.pop %v433
    %v435 = vmul.f32 %v432, 1.442695
    %v436 = vpow.pop %v435
    %v437 = vadd.f32 %v434, 1.0
    %v438 = vadd.f32 %v436, 1.0
    %v439 = vrcp.pop %v437
    %v440 = vmul.f32 1.0, %v439
    %v441 = vrcp.pop %v438
    %v442 = vmul.f32 1.0, %v441
    %v443 = vadd.f32 %v426, %v115
    %v444 = vmul.f32 %v440, %v443
    %v445 = vadd.f32 %v287, %v444
    %v446 = vtanh.pop %v445
    %v447 = vsub.f32 1.0, %v442
    %v448 = vmul.f32 %v447, %v446
    %v449 = vmul.f32 %v442, %v282
    %v450 = vadd.f32 %v448, %v449
    %s451 = scalar_lea.vmem [#allocation2], 8
    %452 = vst [vmem:[%s451] sm:$0xff] %v450
    %s453 = scalar_lea.vmem [#allocation3], 48
    %v454 = vld [vmem:[%s453] sm:$0xff]
    %v455 = vld [vmem:[%s453 + $0x8] sm:$0xff]
    %v456 = vld [vmem:[%s453 + $0x10] sm:$0xff]
    %457 = vmatprep.subr.mxu0 %v63
    %458 = vmatpush1.msra.mxu0 %v62
    %459 = vmatprep.subr.mxu0 %v66
    %460 = vmatpush1.msra.mxu0 %v65
    %461 = vmatprep.subr.mxu0 %v69
    %462 = vmatpush1.msra.mxu0 %v68
    %463 = vmatprep.subr.mxu0 %v72
    %464 = vmatpush1.msra.mxu0 %v71
    %465 = vmatprep.subr.mxu0 %v75
    %466 = vmatpush1.msra.mxu0 %v74
    %467 = vmatprep.subr.mxu0 %v78
    %468 = vmatpush1.msra.mxu0 %v77
    %469 = vmatprep.subr.mxu0 %v81
    %470 = vmatpush1.msra.mxu0 %v80
    %471 = vmatprep.subr.mxu0 %v84
    %472 = vmatpush1.msra.mxu0 %v83
    %473 = vmatprep.subr.mxu0 %v87
    %474 = vmatpush1.msra.mxu0 %v86
    %475 = vmatprep.subr.mxu0 %v90
    %476 = vmatpush1.msra.mxu0 %v89
    %477 = vmatprep.subr.mxu0 %v93
    %478 = vmatpush1.msra.mxu0 %v92
    %479 = vmatprep.subr.mxu0 %v96
    %480 = vmatpush1.msra.mxu0 %v95
    %481 = vmatprep.subr.mxu0 %v99
    %482 = vmatpush1.msra.mxu0 %v98
    %483 = vmatprep.subr.mxu0 %v102
    %484 = vmatpush1.msra.mxu0 %v101
    %485 = vmatprep.subr.mxu0 %v105
    %486 = vmatpush1.msra.mxu0 %v104
    %487 = vmatprep.subr.mxu0 %v108
    %488 = vmatpush1.msra.mxu0 %v107
    %489 = vmatprep.subr.mxu0 0.0
    %490 = vmatpush1.msra.mxu0 0.0
    %491 = vmatprep.subr.mxu0 0.0
    %492 = vmatpush1.msra.mxu0 0.0
    %493 = vmatprep.subr.mxu0 0.0
    %494 = vmatpush1.msra.mxu0 0.0
    %495 = vmatprep.subr.mxu0 0.0
    %496 = vmatpush1.msra.mxu0 0.0
    %497 = vmatprep.subr.mxu0 0.0
    %498 = vmatpush1.msra.mxu0 0.0
    %499 = vmatprep.subr.mxu0 0.0
    %500 = vmatpush1.msra.mxu0 0.0
    %501 = vmatprep.subr.mxu0 0.0
    %502 = vmatpush1.msra.mxu0 0.0
    %503 = vmatprep.subr.mxu0 0.0
    %504 = vmatpush1.msra.mxu0 0.0
    %505 = vmatprep.subr.mxu0 0.0
    %506 = vmatpush1.msra.mxu0 0.0
    %507 = vmatprep.subr.mxu0 0.0
    %508 = vmatpush1.msra.mxu0 0.0
    %509 = vmatprep.subr.mxu0 0.0
    %510 = vmatpush1.msra.mxu0 0.0
    %511 = vmatprep.subr.mxu0 0.0
    %512 = vmatpush1.msra.mxu0 0.0
    %513 = vmatprep.subr.mxu0 0.0
    %514 = vmatpush1.msra.mxu0 0.0
    %515 = vmatprep.subr.mxu0 0.0
    %516 = vmatpush1.msra.mxu0 0.0
    %517 = vmatprep.subr.mxu0 0.0
    %518 = vmatpush1.msra.mxu0 0.0
    %519 = vmatprep.subr.mxu0 0.0
    %520 = vmatpush1.msra.mxu0 0.0
    %521 = vmatprep.mubr.f32.mxu0 0.0
    %522 = vmatmul.mubr.f32.gmra.mrb[0].mxu0 %v450
    %v523 = vpop.f32.mrb[0].mxu0
    %v524 = vadd.f32 0.0, %v523
    %v525 = vpop.f32.mrb[0].mxu0
    %v526 = vadd.f32 0.0, %v525
    %527 = vdwg.mxu0
    %528 = vmatprep.subr.mxu0 0.0
    %529 = vmatpush1.msra.mxu0 %v64
    %530 = vmatprep.subr.mxu0 0.0
    %531 = vmatpush1.msra.mxu0 %v67
    %532 = vmatprep.subr.mxu0 0.0
    %533 = vmatpush1.msra.mxu0 %v70
    %534 = vmatprep.subr.mxu0 0.0
    %535 = vmatpush1.msra.mxu0 %v73
    %536 = vmatprep.subr.mxu0 0.0
    %537 = vmatpush1.msra.mxu0 %v76
    %538 = vmatprep.subr.mxu0 0.0
    %539 = vmatpush1.msra.mxu0 %v79
    %540 = vmatprep.subr.mxu0 0.0
    %541 = vmatpush1.msra.mxu0 %v82
    %542 = vmatprep.subr.mxu0 0.0
    %543 = vmatpush1.msra.mxu0 %v85
    %544 = vmatprep.subr.mxu0 0.0
    %545 = vmatpush1.msra.mxu0 %v88
    %546 = vmatprep.subr.mxu0 0.0
    %547 = vmatpush1.msra.mxu0 %v91
    %548 = vmatprep.subr.mxu0 0.0
    %549 = vmatpush1.msra.mxu0 %v94
    %550 = vmatprep.subr.mxu0 0.0
    %551 = vmatpush1.msra.mxu0 %v97
    %552 = vmatprep.subr.mxu0 0.0
    %553 = vmatpush1.msra.mxu0 %v100
    %554 = vmatprep.subr.mxu0 0.0
    %555 = vmatpush1.msra.mxu0 %v103
    %556 = vmatprep.subr.mxu0 0.0
    %557 = vmatpush1.msra.mxu0 %v106
    %558 = vmatprep.subr.mxu0 0.0
    %559 = vmatpush1.msra.mxu0 %v109
    %560 = vmatprep.subr.mxu0 0.0
    %561 = vmatpush1.msra.mxu0 0.0
    %562 = vmatprep.subr.mxu0 0.0
    %563 = vmatpush1.msra.mxu0 0.0
    %564 = vmatprep.subr.mxu0 0.0
    %565 = vmatpush1.msra.mxu0 0.0
    %566 = vmatprep.subr.mxu0 0.0
    %567 = vmatpush1.msra.mxu0 0.0
    %568 = vmatprep.subr.mxu0 0.0
    %569 = vmatpush1.msra.mxu0 0.0
    %570 = vmatprep.subr.mxu0 0.0
    %571 = vmatpush1.msra.mxu0 0.0
    %572 = vmatprep.subr.mxu0 0.0
    %573 = vmatpush1.msra.mxu0 0.0
    %574 = vmatprep.subr.mxu0 0.0
    %575 = vmatpush1.msra.mxu0 0.0
    %576 = vmatprep.subr.mxu0 0.0
    %577 = vmatpush1.msra.mxu0 0.0
    %578 = vmatprep.subr.mxu0 0.0
    %579 = vmatpush1.msra.mxu0 0.0
    %580 = vmatprep.subr.mxu0 0.0
    %581 = vmatpush1.msra.mxu0 0.0
    %582 = vmatprep.subr.mxu0 0.0
    %583 = vmatpush1.msra.mxu0 0.0
    %584 = vmatprep.subr.mxu0 0.0
    %585 = vmatpush1.msra.mxu0 0.0
    %586 = vmatprep.subr.mxu0 0.0
    %587 = vmatpush1.msra.mxu0 0.0
    %588 = vmatprep.subr.mxu0 0.0
    %589 = vmatpush1.msra.mxu0 0.0
    %590 = vmatprep.subr.mxu0 0.0
    %591 = vmatpush1.msra.mxu0 0.0
    %592 = vmatprep.mubr.f32.mxu0 0.0
    %593 = vmatmul.mubr.f32.gmra.mrb[0].mxu0 %v450
    %v594 = vpop.f32.mrb[0].mxu0
    %v595 = vadd.f32 0.0, %v594
    %v596 = vpop.f32.mrb[0].mxu0
    %597 = vdwg.mxu0
    %v598 = vadd.f32 %v454, %v524
    %v599 = vadd.f32 %v455, %v526
    %v600 = vxor.u32 %v598, 2147483648
    %v601 = vxor.u32 %v599, 2147483648
    %v602 = vmul.f32 %v600, 1.442695
    %v603 = vpow.pop %v602
    %v604 = vmul.f32 %v601, 1.442695
    %v605 = vpow.pop %v604
    %v606 = vadd.f32 %v603, 1.0
    %v607 = vadd.f32 %v605, 1.0
    %v608 = vrcp.pop %v606
    %v609 = vmul.f32 1.0, %v608
    %v610 = vrcp.pop %v607
    %v611 = vmul.f32 1.0, %v610
    %v612 = vadd.f32 %v595, %v115
    %v613 = vmul.f32 %v609, %v612
    %v614 = vadd.f32 %v456, %v613
    %v615 = vtanh.pop %v614
    %v616 = vsub.f32 1.0, %v611
    %v617 = vmul.f32 %v616, %v615
    %v618 = vmul.f32 %v611, %v450
    %v619 = vadd.f32 %v617, %v618
    %s620 = scalar_lea.vmem [#allocation2], 16
    %621 = vst [vmem:[%s620] sm:$0xff] %v619
    %s622 = scalar_lea.vmem [#allocation3], 72
    %v623 = vld [vmem:[%s622] sm:$0xff]
    %v624 = vld [vmem:[%s622 + $0x8] sm:$0xff]
    %v625 = vld [vmem:[%s622 + $0x10] sm:$0xff]
    %626 = vmatprep.subr.mxu0 %v63
    %627 = vmatpush1.msra.mxu0 %v62
    %628 = vmatprep.subr.mxu0 %v66
    %629 = vmatpush1.msra.mxu0 %v65
    %630 = vmatprep.subr.mxu0 %v69
    %631 = vmatpush1.msra.mxu0 %v68
    %632 = vmatprep.subr.mxu0 %v72
    %633 = vmatpush1.msra.mxu0 %v71
    %634 = vmatprep.subr.mxu0 %v75
    %635 = vmatpush1.msra.mxu0 %v74
    %636 = vmatprep.subr.mxu0 %v78
    %637 = vmatpush1.msra.mxu0 %v77
    %638 = vmatprep.subr.mxu0 %v81
    %639 = vmatpush1.msra.mxu0 %v80
    %640 = vmatprep.subr.mxu0 %v84
    %641 = vmatpush1.msra.mxu0 %v83
    %642 = vmatprep.subr.mxu0 %v87
    %643 = vmatpush1.msra.mxu0 %v86
    %644 = vmatprep.subr.mxu0 %v90
    %645 = vmatpush1.msra.mxu0 %v89
    %646 = vmatprep.subr.mxu0 %v93
    %647 = vmatpush1.msra.mxu0 %v92
    %648 = vmatprep.subr.mxu0 %v96
    %649 = vmatpush1.msra.mxu0 %v95
    %650 = vmatprep.subr.mxu0 %v99
    %651 = vmatpush1.msra.mxu0 %v98
    %652 = vmatprep.subr.mxu0 %v102
    %653 = vmatpush1.msra.mxu0 %v101
    %654 = vmatprep.subr.mxu0 %v105
    %655 = vmatpush1.msra.mxu0 %v104
    %656 = vmatprep.subr.mxu0 %v108
    %657 = vmatpush1.msra.mxu0 %v107
    %658 = vmatprep.subr.mxu0 0.0
    %659 = vmatpush1.msra.mxu0 0.0
    %660 = vmatprep.subr.mxu0 0.0
    %661 = vmatpush1.msra.mxu0 0.0
    %662 = vmatprep.subr.mxu0 0.0
    %663 = vmatpush1.msra.mxu0 0.0
    %664 = vmatprep.subr.mxu0 0.0
    %665 = vmatpush1.msra.mxu0 0.0
    %666 = vmatprep.subr.mxu0 0.0
    %667 = vmatpush1.msra.mxu0 0.0
    %668 = vmatprep.subr.mxu0 0.0
    %669 = vmatpush1.msra.mxu0 0.0
    %670 = vmatprep.subr.mxu0 0.0
    %671 = vmatpush1.msra.mxu0 0.0
    %672 = vmatprep.subr.mxu0 0.0
    %673 = vmatpush1.msra.mxu0 0.0
    %674 = vmatprep.subr.mxu0 0.0
    %675 = vmatpush1.msra.mxu0 0.0
    %676 = vmatprep.subr.mxu0 0.0
    %677 = vmatpush1.msra.mxu0 0.0
    %678 = vmatprep.subr.mxu0 0.0
    %679 = vmatpush1.msra.mxu0 0.0
    %680 = vmatprep.subr.mxu0 0.0
    %681 = vmatpush1.msra.mxu0 0.0
    %682 = vmatprep.subr.mxu0 0.0
    %683 = vmatpush1.msra.mxu0 0.0
    %684 = vmatprep.subr.mxu0 0.0
    %685 = vmatpush1.msra.mxu0 0.0
    %686 = vmatprep.subr.mxu0 0.0
    %687 = vmatpush1.msra.mxu0 0.0
    %688 = vmatprep.subr.mxu0 0.0
    %689 = vmatpush1.msra.mxu0 0.0
    %690 = vmatprep.mubr.f32.mxu0 0.0
    %691 = vmatmul.mubr.f32.gmra.mrb[0].mxu0 %v619
    %v692 = vpop.f32.mrb[0].mxu0
    %v693 = vadd.f32 0.0, %v692
    %v694 = vpop.f32.mrb[0].mxu0
    %v695 = vadd.f32 0.0, %v694
    %696 = vdwg.mxu0
    %697 = vmatprep.subr.mxu0 0.0
    %698 = vmatpush1.msra.mxu0 %v64
    %699 = vmatprep.subr.mxu0 0.0
    %700 = vmatpush1.msra.mxu0 %v67
    %701 = vmatprep.subr.mxu0 0.0
    %702 = vmatpush1.msra.mxu0 %v70
    %703 = vmatprep.subr.mxu0 0.0
    %704 = vmatpush1.msra.mxu0 %v73
    %705 = vmatprep.subr.mxu0 0.0
    %706 = vmatpush1.msra.mxu0 %v76
    %707 = vmatprep.subr.mxu0 0.0
    %708 = vmatpush1.msra.mxu0 %v79
    %709 = vmatprep.subr.mxu0 0.0
    %710 = vmatpush1.msra.mxu0 %v82
    %711 = vmatprep.subr.mxu0 0.0
    %712 = vmatpush1.msra.mxu0 %v85
    %713 = vmatprep.subr.mxu0 0.0
    %714 = vmatpush1.msra.mxu0 %v88
    %715 = vmatprep.subr.mxu0 0.0
    %716 = vmatpush1.msra.mxu0 %v91
    %717 = vmatprep.subr.mxu0 0.0
    %718 = vmatpush1.msra.mxu0 %v94
    %719 = vmatprep.subr.mxu0 0.0
    %720 = vmatpush1.msra.mxu0 %v97
    %721 = vmatprep.subr.mxu0 0.0
    %722 = vmatpush1.msra.mxu0 %v100
    %723 = vmatprep.subr.mxu0 0.0
    %724 = vmatpush1.msra.mxu0 %v103
    %725 = vmatprep.subr.mxu0 0.0
    %726 = vmatpush1.msra.mxu0 %v106
    %727 = vmatprep.subr.mxu0 0.0
    %728 = vmatpush1.msra.mxu0 %v109
    %729 = vmatprep.subr.mxu0 0.0
    %730 = vmatpush1.msra.mxu0 0.0
    %731 = vmatprep.subr.mxu0 0.0
    %732 = vmatpush1.msra.mxu0 0.0
    %733 = vmatprep.subr.mxu0 0.0
    %734 = vmatpush1.msra.mxu0 0.0
    %735 = vmatprep.subr.mxu0 0.0
    %736 = vmatpush1.msra.mxu0 0.0
    %737 = vmatprep.subr.mxu0 0.0
    %738 = vmatpush1.msra.mxu0 0.0
    %739 = vmatprep.subr.mxu0 0.0
    %740 = vmatpush1.msra.mxu0 0.0
    %741 = vmatprep.subr.mxu0 0.0
    %742 = vmatpush1.msra.mxu0 0.0
    %743 = vmatprep.subr.mxu0 0.0
    %744 = vmatpush1.msra.mxu0 0.0
    %745 = vmatprep.subr.mxu0 0.0
    %746 = vmatpush1.msra.mxu0 0.0
    %747 = vmatprep.subr.mxu0 0.0
    %748 = vmatpush1.msra.mxu0 0.0
    %749 = vmatprep.subr.mxu0 0.0
    %750 = vmatpush1.msra.mxu0 0.0
    %751 = vmatprep.subr.mxu0 0.0
    %752 = vmatpush1.msra.mxu0 0.0
    %753 = vmatprep.subr.mxu0 0.0
    %754 = vmatpush1.msra.mxu0 0.0
    %755 = vmatprep.subr.mxu0 0.0
    %756 = vmatpush1.msra.mxu0 0.0
    %757 = vmatprep.subr.mxu0 0.0
    %758 = vmatpush1.msra.mxu0 0.0
    %759 = vmatprep.subr.mxu0 0.0
    %760 = vmatpush1.msra.mxu0 0.0
    %761 = vmatprep.mubr.f32.mxu0 0.0
    %762 = vmatmul.mubr.f32.gmra.mrb[0].mxu0 %v619
    %v763 = vpop.f32.mrb[0].mxu0
    %v764 = vadd.f32 0.0, %v763
    %v765 = vpop.f32.mrb[0].mxu0
    %766 = vdwg.mxu0
    %v767 = vadd.f32 %v623, %v693
    %v768 = vadd.f32 %v624, %v695
    %v769 = vxor.u32 %v767, 2147483648
    %v770 = vxor.u32 %v768, 2147483648
    %v771 = vmul.f32 %v769, 1.442695
    %v772 = vpow.pop %v771
    %v773 = vmul.f32 %v770, 1.442695
    %v774 = vpow.pop %v773
    %v775 = vadd.f32 %v772, 1.0
    %v776 = vadd.f32 %v774, 1.0
    %v777 = vrcp.pop %v775
    %v778 = vmul.f32 1.0, %v777
    %v779 = vrcp.pop %v776
    %v780 = vmul.f32 1.0, %v779
    %v781 = vadd.f32 %v764, %v115
    %v782 = vmul.f32 %v778, %v781
    %v783 = vadd.f32 %v625, %v782
    %v784 = vtanh.pop %v783
    %v785 = vsub.f32 1.0, %v780
    %v786 = vmul.f32 %v785, %v784
    %v787 = vmul.f32 %v780, %v619
    %v788 = vadd.f32 %v786, %v787
    %s789 = scalar_lea.vmem [#allocation2], 24
    %790 = vst [vmem:[%s789] sm:$0xff] %v788
    %s791 = scalar_lea.vmem [#allocation3], 96
    %v792 = vld [vmem:[%s791] sm:$0xff]
    %v793 = vld [vmem:[%s791 + $0x8] sm:$0xff]
    %v794 = vld [vmem:[%s791 + $0x10] sm:$0xff]
    %795 = vmatprep.subr.mxu0 %v63
    %796 = vmatpush1.msra.mxu0 %v62
    %797 = vmatprep.subr.mxu0 %v66
    %798 = vmatpush1.msra.mxu0 %v65
    %799 = vmatprep.subr.mxu0 %v69
    %800 = vmatpush1.msra.mxu0 %v68
    %801 = vmatprep.subr.mxu0 %v72
    %802 = vmatpush1.msra.mxu0 %v71
    %803 = vmatprep.subr.mxu0 %v75
    %804 = vmatpush1.msra.mxu0 %v74
    %805 = vmatprep.subr.mxu0 %v78
    %806 = vmatpush1.msra.mxu0 %v77
    %807 = vmatprep.subr.mxu0 %v81
    %808 = vmatpush1.msra.mxu0 %v80
    %809 = vmatprep.subr.mxu0 %v84
    %810 = vmatpush1.msra.mxu0 %v83
    %811 = vmatprep.subr.mxu0 %v87
    %812 = vmatpush1.msra.mxu0 %v86
    %813 = vmatprep.subr.mxu0 %v90
    %814 = vmatpush1.msra.mxu0 %v89
    %815 = vmatprep.subr.mxu0 %v93
    %816 = vmatpush1.msra.mxu0 %v92
    %817 = vmatprep.subr.mxu0 %v96
    %818 = vmatpush1.msra.mxu0 %v95
    %819 = vmatprep.subr.mxu0 %v99
    %820 = vmatpush1.msra.mxu0 %v98
    %821 = vmatprep.subr.mxu0 %v102
    %822 = vmatpush1.msra.mxu0 %v101
    %823 = vmatprep.subr.mxu0 %v105
    %824 = vmatpush1.msra.mxu0 %v104
    %825 = vmatprep.subr.mxu0 %v108
    %826 = vmatpush1.msra.mxu0 %v107
    %827 = vmatprep.subr.mxu0 0.0
    %828 = vmatpush1.msra.mxu0 0.0
    %829 = vmatprep.subr.mxu0 0.0
    %830 = vmatpush1.msra.mxu0 0.0
    %831 = vmatprep.subr.mxu0 0.0
    %832 = vmatpush1.msra.mxu0 0.0
    %833 = vmatprep.subr.mxu0 0.0
    %834 = vmatpush1.msra.mxu0 0.0
    %835 = vmatprep.subr.mxu0 0.0
    %836 = vmatpush1.msra.mxu0 0.0
    %837 = vmatprep.subr.mxu0 0.0
    %838 = vmatpush1.msra.mxu0 0.0
    %839 = vmatprep.subr.mxu0 0.0
    %840 = vmatpush1.msra.mxu0 0.0
    %841 = vmatprep.subr.mxu0 0.0
    %842 = vmatpush1.msra.mxu0 0.0
    %843 = vmatprep.subr.mxu0 0.0
    %844 = vmatpush1.msra.mxu0 0.0
    %845 = vmatprep.subr.mxu0 0.0
    %846 = vmatpush1.msra.mxu0 0.0
    %847 = vmatprep.subr.mxu0 0.0
    %848 = vmatpush1.msra.mxu0 0.0
    %849 = vmatprep.subr.mxu0 0.0
    %850 = vmatpush1.msra.mxu0 0.0
    %851 = vmatprep.subr.mxu0 0.0
    %852 = vmatpush1.msra.mxu0 0.0
    %853 = vmatprep.subr.mxu0 0.0
    %854 = vmatpush1.msra.mxu0 0.0
    %855 = vmatprep.subr.mxu0 0.0
    %856 = vmatpush1.msra.mxu0 0.0
    %857 = vmatprep.subr.mxu0 0.0
    %858 = vmatpush1.msra.mxu0 0.0
    %859 = vmatprep.mubr.f32.mxu0 0.0
    %860 = vmatmul.mubr.f32.gmra.mrb[0].mxu0 %v788
    %v861 = vpop.f32.mrb[0].mxu0
    %v862 = vadd.f32 0.0, %v861
    %v863 = vpop.f32.mrb[0].mxu0
    %v864 = vadd.f32 0.0, %v863
    %865 = vdwg.mxu0
    %866 = vmatprep.subr.mxu0 0.0
    %867 = vmatpush1.msra.mxu0 %v64
    %868 = vmatprep.subr.mxu0 0.0
    %869 = vmatpush1.msra.mxu0 %v67
    %870 = vmatprep.subr.mxu0 0.0
    %871 = vmatpush1.msra.mxu0 %v70
    %872 = vmatprep.subr.mxu0 0.0
    %873 = vmatpush1.msra.mxu0 %v73
    %874 = vmatprep.subr.mxu0 0.0
    %875 = vmatpush1.msra.mxu0 %v76
    %876 = vmatprep.subr.mxu0 0.0
    %877 = vmatpush1.msra.mxu0 %v79
    %878 = vmatprep.subr.mxu0 0.0
    %879 = vmatpush1.msra.mxu0 %v82
    %880 = vmatprep.subr.mxu0 0.0
    %881 = vmatpush1.msra.mxu0 %v85
    %882 = vmatprep.subr.mxu0 0.0
    %883 = vmatpush1.msra.mxu0 %v88
    %884 = vmatprep.subr.mxu0 0.0
    %885 = vmatpush1.msra.mxu0 %v91
    %886 = vmatprep.subr.mxu0 0.0
    %887 = vmatpush1.msra.mxu0 %v94
    %888 = vmatprep.subr.mxu0 0.0
    %889 = vmatpush1.msra.mxu0 %v97
    %890 = vmatprep.subr.mxu0 0.0
    %891 = vmatpush1.msra.mxu0 %v100
    %892 = vmatprep.subr.mxu0 0.0
    %893 = vmatpush1.msra.mxu0 %v103
    %894 = vmatprep.subr.mxu0 0.0
    %895 = vmatpush1.msra.mxu0 %v106
    %896 = vmatprep.subr.mxu0 0.0
    %897 = vmatpush1.msra.mxu0 %v109
    %898 = vmatprep.subr.mxu0 0.0
    %899 = vmatpush1.msra.mxu0 0.0
    %900 = vmatprep.subr.mxu0 0.0
    %901 = vmatpush1.msra.mxu0 0.0
    %902 = vmatprep.subr.mxu0 0.0
    %903 = vmatpush1.msra.mxu0 0.0
    %904 = vmatprep.subr.mxu0 0.0
    %905 = vmatpush1.msra.mxu0 0.0
    %906 = vmatprep.subr.mxu0 0.0
    %907 = vmatpush1.msra.mxu0 0.0
    %908 = vmatprep.subr.mxu0 0.0
    %909 = vmatpush1.msra.mxu0 0.0
    %910 = vmatprep.subr.mxu0 0.0
    %911 = vmatpush1.msra.mxu0 0.0
    %912 = vmatprep.subr.mxu0 0.0
    %913 = vmatpush1.msra.mxu0 0.0
    %914 = vmatprep.subr.mxu0 0.0
    %915 = vmatpush1.msra.mxu0 0.0
    %916 = vmatprep.subr.mxu0 0.0
    %917 = vmatpush1.msra.mxu0 0.0
    %918 = vmatprep.subr.mxu0 0.0
    %919 = vmatpush1.msra.mxu0 0.0
    %920 = vmatprep.subr.mxu0 0.0
    %921 = vmatpush1.msra.mxu0 0.0
    %922 = vmatprep.subr.mxu0 0.0
    %923 = vmatpush1.msra.mxu0 0.0
    %924 = vmatprep.subr.mxu0 0.0
    %925 = vmatpush1.msra.mxu0 0.0
    %926 = vmatprep.subr.mxu0 0.0
    %927 = vmatpush1.msra.mxu0 0.0
    %928 = vmatprep.subr.mxu0 0.0
    %929 = vmatpush1.msra.mxu0 0.0
    %930 = vmatprep.mubr.f32.mxu0 0.0
    %931 = vmatmul.mubr.f32.gmra.mrb[0].mxu0 %v788
    %v932 = vpop.f32.mrb[0].mxu0
    %v933 = vadd.f32 0.0, %v932
    %v934 = vpop.f32.mrb[0].mxu0
    %935 = vdwg.mxu0
    %v936 = vadd.f32 %v792, %v862
    %v937 = vadd.f32 %v793, %v864
    %v938 = vxor.u32 %v936, 2147483648
    %v939 = vxor.u32 %v937, 2147483648
    %v940 = vmul.f32 %v938, 1.442695
    %v941 = vpow.pop %v940
    %v942 = vmul.f32 %v939, 1.442695
    %v943 = vpow.pop %v942
    %v944 = vadd.f32 %v941, 1.0
    %v945 = vadd.f32 %v943, 1.0
    %v946 = vrcp.pop %v944
    %v947 = vmul.f32 1.0, %v946
    %v948 = vrcp.pop %v945
    %v949 = vmul.f32 1.0, %v948
    %v950 = vadd.f32 %v933, %v115
    %v951 = vmul.f32 %v947, %v950
    %v952 = vadd.f32 %v794, %v951
    %v953 = vtanh.pop %v952
    %v954 = vsub.f32 1.0, %v949
    %v955 = vmul.f32 %v954, %v953
    %v956 = vmul.f32 %v949, %v788
    %v957 = vadd.f32 %v955, %v956
    %s958 = scalar_lea.vmem [#allocation2], 32
    %959 = vst [vmem:[%s958] sm:$0xff] %v957
    %s960 = scalar_lea.vmem [#allocation3], 120
    %v961 = vld [vmem:[%s960] sm:$0xff]
    %v962 = vld [vmem:[%s960 + $0x8] sm:$0xff]
    %v963 = vld [vmem:[%s960 + $0x10] sm:$0xff]
    %964 = vmatprep.subr.mxu0 %v63
    %965 = vmatpush1.msra.mxu0 %v62
    %966 = vmatprep.subr.mxu0 %v66
    %967 = vmatpush1.msra.mxu0 %v65
    %968 = vmatprep.subr.mxu0 %v69
    %969 = vmatpush1.msra.mxu0 %v68
    %970 = vmatprep.subr.mxu0 %v72
    %971 = vmatpush1.msra.mxu0 %v71
    %972 = vmatprep.subr.mxu0 %v75
    %973 = vmatpush1.msra.mxu0 %v74
    %974 = vmatprep.subr.mxu0 %v78
    %975 = vmatpush1.msra.mxu0 %v77
    %976 = vmatprep.subr.mxu0 %v81
    %977 = vmatpush1.msra.mxu0 %v80
    %978 = vmatprep.subr.mxu0 %v84
    %979 = vmatpush1.msra.mxu0 %v83
    %980 = vmatprep.subr.mxu0 %v87
    %981 = vmatpush1.msra.mxu0 %v86
    %982 = vmatprep.subr.mxu0 %v90
    %983 = vmatpush1.msra.mxu0 %v89
    %984 = vmatprep.subr.mxu0 %v93
    %985 = vmatpush1.msra.mxu0 %v92
    %986 = vmatprep.subr.mxu0 %v96
    %987 = vmatpush1.msra.mxu0 %v95
    %988 = vmatprep.subr.mxu0 %v99
    %989 = vmatpush1.msra.mxu0 %v98
    %990 = vmatprep.subr.mxu0 %v102
    %991 = vmatpush1.msra.mxu0 %v101
    %992 = vmatprep.subr.mxu0 %v105
    %993 = vmatpush1.msra.mxu0 %v104
    %994 = vmatprep.subr.mxu0 %v108
    %995 = vmatpush1.msra.mxu0 %v107
    %996 = vmatprep.subr.mxu0 0.0
    %997 = vmatpush1.msra.mxu0 0.0
    %998 = vmatprep.subr.mxu0 0.0
    %999 = vmatpush1.msra.mxu0 0.0
    %1000 = vmatprep.subr.mxu0 0.0
    %1001 = vmatpush1.msra.mxu0 0.0
    %1002 = vmatprep.subr.mxu0 0.0
    %1003 = vmatpush1.msra.mxu0 0.0
    %1004 = vmatprep.subr.mxu0 0.0
    %1005 = vmatpush1.msra.mxu0 0.0
    %1006 = vmatprep.subr.mxu0 0.0
    %1007 = vmatpush1.msra.mxu0 0.0
    %1008 = vmatprep.subr.mxu0 0.0
    %1009 = vmatpush1.msra.mxu0 0.0
    %1010 = vmatprep.subr.mxu0 0.0
    %1011 = vmatpush1.msra.mxu0 0.0
    %1012 = vmatprep.subr.mxu0 0.0
    %1013 = vmatpush1.msra.mxu0 0.0
    %1014 = vmatprep.subr.mxu0 0.0
    %1015 = vmatpush1.msra.mxu0 0.0
    %1016 = vmatprep.subr.mxu0 0.0
    %1017 = vmatpush1.msra.mxu0 0.0
    %1018 = vmatprep.subr.mxu0 0.0
    %1019 = vmatpush1.msra.mxu0 0.0
    %1020 = vmatprep.subr.mxu0 0.0
    %1021 = vmatpush1.msra.mxu0 0.0
    %1022 = vmatprep.subr.mxu0 0.0
    %1023 = vmatpush1.msra.mxu0 0.0
    %1024 = vmatprep.subr.mxu0 0.0
    %1025 = vmatpush1.msra.mxu0 0.0
    %1026 = vmatprep.subr.mxu0 0.0
    %1027 = vmatpush1.msra.mxu0 0.0
    %1028 = vmatprep.mubr.f32.mxu0 0.0
    %1029 = vmatmul.mubr.f32.gmra.mrb[0].mxu0 %v957
    %v1030 = vpop.f32.mrb[0].mxu0
    %v1031 = vadd.f32 0.0, %v1030
    %v1032 = vpop.f32.mrb[0].mxu0
    %v1033 = vadd.f32 0.0, %v1032
    %1034 = vdwg.mxu0
    %1035 = vmatprep.subr.mxu0 0.0
    %1036 = vmatpush1.msra.mxu0 %v64
    %1037 = vmatprep.subr.mxu0 0.0
    %1038 = vmatpush1.msra.mxu0 %v67
    %1039 = vmatprep.subr.mxu0 0.0
    %1040 = vmatpush1.msra.mxu0 %v70
    %1041 = vmatprep.subr.mxu0 0.0
    %1042 = vmatpush1.msra.mxu0 %v73
    %1043 = vmatprep.subr.mxu0 0.0
    %1044 = vmatpush1.msra.mxu0 %v76
    %1045 = vmatprep.subr.mxu0 0.0
    %1046 = vmatpush1.msra.mxu0 %v79
    %1047 = vmatprep.subr.mxu0 0.0
    %1048 = vmatpush1.msra.mxu0 %v82
    %1049 = vmatprep.subr.mxu0 0.0
    %1050 = vmatpush1.msra.mxu0 %v85
    %1051 = vmatprep.subr.mxu0 0.0
    %1052 = vmatpush1.msra.mxu0 %v88
    %1053 = vmatprep.subr.mxu0 0.0
    %1054 = vmatpush1.msra.mxu0 %v91
    %1055 = vmatprep.subr.mxu0 0.0
    %1056 = vmatpush1.msra.mxu0 %v94
    %1057 = vmatprep.subr.mxu0 0.0
    %1058 = vmatpush1.msra.mxu0 %v97
    %1059 = vmatprep.subr.mxu0 0.0
    %1060 = vmatpush1.msra.mxu0 %v100
    %1061 = vmatprep.subr.mxu0 0.0
    %1062 = vmatpush1.msra.mxu0 %v103
    %1063 = vmatprep.subr.mxu0 0.0
    %1064 = vmatpush1.msra.mxu0 %v106
    %1065 = vmatprep.subr.mxu0 0.0
    %1066 = vmatpush1.msra.mxu0 %v109
    %1067 = vmatprep.subr.mxu0 0.0
    %1068 = vmatpush1.msra.mxu0 0.0
    %1069 = vmatprep.subr.mxu0 0.0
    %1070 = vmatpush1.msra.mxu0 0.0
    %1071 = vmatprep.subr.mxu0 0.0
    %1072 = vmatpush1.msra.mxu0 0.0
    %1073 = vmatprep.subr.mxu0 0.0
    %1074 = vmatpush1.msra.mxu0 0.0
    %1075 = vmatprep.subr.mxu0 0.0
    %1076 = vmatpush1.msra.mxu0 0.0
    %1077 = vmatprep.subr.mxu0 0.0
    %1078 = vmatpush1.msra.mxu0 0.0
    %1079 = vmatprep.subr.mxu0 0.0
    %1080 = vmatpush1.msra.mxu0 0.0
    %1081 = vmatprep.subr.mxu0 0.0
    %1082 = vmatpush1.msra.mxu0 0.0
    %1083 = vmatprep.subr.mxu0 0.0
    %1084 = vmatpush1.msra.mxu0 0.0
    %1085 = vmatprep.subr.mxu0 0.0
    %1086 = vmatpush1.msra.mxu0 0.0
    %1087 = vmatprep.subr.mxu0 0.0
    %1088 = vmatpush1.msra.mxu0 0.0
    %1089 = vmatprep.subr.mxu0 0.0
    %1090 = vmatpush1.msra.mxu0 0.0
    %1091 = vmatprep.subr.mxu0 0.0
    %1092 = vmatpush1.msra.mxu0 0.0
    %1093 = vmatprep.subr.mxu0 0.0
    %1094 = vmatpush1.msra.mxu0 0.0
    %1095 = vmatprep.subr.mxu0 0.0
    %1096 = vmatpush1.msra.mxu0 0.0
    %1097 = vmatprep.subr.mxu0 0.0
    %1098 = vmatpush1.msra.mxu0 0.0
    %1099 = vmatprep.mubr.f32.mxu0 0.0
    %1100 = vmatmul.mubr.f32.gmra.mrb[0].mxu0 %v957
    %v1101 = vpop.f32.mrb[0].mxu0
    %v1102 = vadd.f32 0.0, %v1101
    %v1103 = vpop.f32.mrb[0].mxu0
    %1104 = vdwg.mxu0
    %v1105 = vadd.f32 %v961, %v1031
    %v1106 = vadd.f32 %v962, %v1033
    %v1107 = vxor.u32 %v1105, 2147483648
    %v1108 = vxor.u32 %v1106, 2147483648
    %v1109 = vmul.f32 %v1107, 1.442695
    %v1110 = vpow.pop %v1109
    %v1111 = vmul.f32 %v1108, 1.442695
    %v1112 = vpow.pop %v1111
    %v1113 = vadd.f32 %v1110, 1.0
    %v1114 = vadd.f32 %v1112, 1.0
    %v1115 = vrcp.pop %v1113
    %v1116 = vmul.f32 1.0, %v1115
    %v1117 = vrcp.pop %v1114
    %v1118 = vmul.f32 1.0, %v1117
    %v1119 = vadd.f32 %v1102, %v115
    %v1120 = vmul.f32 %v1116, %v1119
    %v1121 = vadd.f32 %v963, %v1120
    %v1122 = vtanh.pop %v1121
    %v1123 = vsub.f32 1.0, %v1118
    %v1124 = vmul.f32 %v1123, %v1122
    %v1125 = vmul.f32 %v1118, %v957
    %v1126 = vadd.f32 %v1124, %v1125
    %s1127 = scalar_lea.vmem [#allocation2], 40
    %1128 = vst [vmem:[%s1127] sm:$0xff] %v1126
    %s1129 = scalar_lea.vmem [#allocation3], 144
    %v1130 = vld [vmem:[%s1129] sm:$0xff]
    %v1131 = vld [vmem:[%s1129 + $0x8] sm:$0xff]
    %v1132 = vld [vmem:[%s1129 + $0x10] sm:$0xff]
    %1133 = vmatprep.subr.mxu0 %v63
    %1134 = vmatpush1.msra.mxu0 %v62
    %1135 = vmatprep.subr.mxu0 %v66
    %1136 = vmatpush1.msra.mxu0 %v65
    %1137 = vmatprep.subr.mxu0 %v69
    %1138 = vmatpush1.msra.mxu0 %v68
    %1139 = vmatprep.subr.mxu0 %v72
    %1140 = vmatpush1.msra.mxu0 %v71
    %1141 = vmatprep.subr.mxu0 %v75
    %1142 = vmatpush1.msra.mxu0 %v74
    %1143 = vmatprep.subr.mxu0 %v78
    %1144 = vmatpush1.msra.mxu0 %v77
    %1145 = vmatprep.subr.mxu0 %v81
    %1146 = vmatpush1.msra.mxu0 %v80
    %1147 = vmatprep.subr.mxu0 %v84
    %1148 = vmatpush1.msra.mxu0 %v83
    %1149 = vmatprep.subr.mxu0 %v87
    %1150 = vmatpush1.msra.mxu0 %v86
    %1151 = vmatprep.subr.mxu0 %v90
    %1152 = vmatpush1.msra.mxu0 %v89
    %1153 = vmatprep.subr.mxu0 %v93
    %1154 = vmatpush1.msra.mxu0 %v92
    %1155 = vmatprep.subr.mxu0 %v96
    %1156 = vmatpush1.msra.mxu0 %v95
    %1157 = vmatprep.subr.mxu0 %v99
    %1158 = vmatpush1.msra.mxu0 %v98
    %1159 = vmatprep.subr.mxu0 %v102
    %1160 = vmatpush1.msra.mxu0 %v101
    %1161 = vmatprep.subr.mxu0 %v105
    %1162 = vmatpush1.msra.mxu0 %v104
    %1163 = vmatprep.subr.mxu0 %v108
    %1164 = vmatpush1.msra.mxu0 %v107
    %1165 = vmatprep.subr.mxu0 0.0
    %1166 = vmatpush1.msra.mxu0 0.0
    %1167 = vmatprep.subr.mxu0 0.0
    %1168 = vmatpush1.msra.mxu0 0.0
    %1169 = vmatprep.subr.mxu0 0.0
    %1170 = vmatpush1.msra.mxu0 0.0
    %1171 = vmatprep.subr.mxu0 0.0
    %1172 = vmatpush1.msra.mxu0 0.0
    %1173 = vmatprep.subr.mxu0 0.0
    %1174 = vmatpush1.msra.mxu0 0.0
    %1175 = vmatprep.subr.mxu0 0.0
    %1176 = vmatpush1.msra.mxu0 0.0
    %1177 = vmatprep.subr.mxu0 0.0
    %1178 = vmatpush1.msra.mxu0 0.0
    %1179 = vmatprep.subr.mxu0 0.0
    %1180 = vmatpush1.msra.mxu0 0.0
    %1181 = vmatprep.subr.mxu0 0.0
    %1182 = vmatpush1.msra.mxu0 0.0
    %1183 = vmatprep.subr.mxu0 0.0
    %1184 = vmatpush1.msra.mxu0 0.0
    %1185 = vmatprep.subr.mxu0 0.0
    %1186 = vmatpush1.msra.mxu0 0.0
    %1187 = vmatprep.subr.mxu0 0.0
    %1188 = vmatpush1.msra.mxu0 0.0
    %1189 = vmatprep.subr.mxu0 0.0
    %1190 = vmatpush1.msra.mxu0 0.0
    %1191 = vmatprep.subr.mxu0 0.0
    %1192 = vmatpush1.msra.mxu0 0.0
    %1193 = vmatprep.subr.mxu0 0.0
    %1194 = vmatpush1.msra.mxu0 0.0
    %1195 = vmatprep.subr.mxu0 0.0
    %1196 = vmatpush1.msra.mxu0 0.0
    %1197 = vmatprep.mubr.f32.mxu0 0.0
    %1198 = vmatmul.mubr.f32.gmra.mrb[0].mxu0 %v1126
    %v1199 = vpop.f32.mrb[0].mxu0
    %v1200 = vadd.f32 0.0, %v1199
    %v1201 = vpop.f32.mrb[0].mxu0
    %v1202 = vadd.f32 0.0, %v1201
    %1203 = vdwg.mxu0
    %1204 = vmatprep.subr.mxu0 0.0
    %1205 = vmatpush1.msra.mxu0 %v64
    %1206 = vmatprep.subr.mxu0 0.0
    %1207 = vmatpush1.msra.mxu0 %v67
    %1208 = vmatprep.subr.mxu0 0.0
    %1209 = vmatpush1.msra.mxu0 %v70
    %1210 = vmatprep.subr.mxu0 0.0
    %1211 = vmatpush1.msra.mxu0 %v73
    %1212 = vmatprep.subr.mxu0 0.0
    %1213 = vmatpush1.msra.mxu0 %v76
    %1214 = vmatprep.subr.mxu0 0.0
    %1215 = vmatpush1.msra.mxu0 %v79
    %1216 = vmatprep.subr.mxu0 0.0
    %1217 = vmatpush1.msra.mxu0 %v82
    %1218 = vmatprep.subr.mxu0 0.0
    %1219 = vmatpush1.msra.mxu0 %v85
    %1220 = vmatprep.subr.mxu0 0.0
    %1221 = vmatpush1.msra.mxu0 %v88
    %1222 = vmatprep.subr.mxu0 0.0
    %1223 = vmatpush1.msra.mxu0 %v91
    %1224 = vmatprep.subr.mxu0 0.0
    %1225 = vmatpush1.msra.mxu0 %v94
    %1226 = vmatprep.subr.mxu0 0.0
    %1227 = vmatpush1.msra.mxu0 %v97
    %1228 = vmatprep.subr.mxu0 0.0
    %1229 = vmatpush1.msra.mxu0 %v100
    %1230 = vmatprep.subr.mxu0 0.0
    %1231 = vmatpush1.msra.mxu0 %v103
    %1232 = vmatprep.subr.mxu0 0.0
    %1233 = vmatpush1.msra.mxu0 %v106
    %1234 = vmatprep.subr.mxu0 0.0
    %1235 = vmatpush1.msra.mxu0 %v109
    %1236 = vmatprep.subr.mxu0 0.0
    %1237 = vmatpush1.msra.mxu0 0.0
    %1238 = vmatprep.subr.mxu0 0.0
    %1239 = vmatpush1.msra.mxu0 0.0
    %1240 = vmatprep.subr.mxu0 0.0
    %1241 = vmatpush1.msra.mxu0 0.0
    %1242 = vmatprep.subr.mxu0 0.0
    %1243 = vmatpush1.msra.mxu0 0.0
    %1244 = vmatprep.subr.mxu0 0.0
    %1245 = vmatpush1.msra.mxu0 0.0
    %1246 = vmatprep.subr.mxu0 0.0
    %1247 = vmatpush1.msra.mxu0 0.0
    %1248 = vmatprep.subr.mxu0 0.0
    %1249 = vmatpush1.msra.mxu0 0.0
    %1250 = vmatprep.subr.mxu0 0.0
    %1251 = vmatpush1.msra.mxu0 0.0
    %1252 = vmatprep.subr.mxu0 0.0
    %1253 = vmatpush1.msra.mxu0 0.0
    %1254 = vmatprep.subr.mxu0 0.0
    %1255 = vmatpush1.msra.mxu0 0.0
    %1256 = vmatprep.subr.mxu0 0.0
    %1257 = vmatpush1.msra.mxu0 0.0
    %1258 = vmatprep.subr.mxu0 0.0
    %1259 = vmatpush1.msra.mxu0 0.0
    %1260 = vmatprep.subr.mxu0 0.0
    %1261 = vmatpush1.msra.mxu0 0.0
    %1262 = vmatprep.subr.mxu0 0.0
    %1263 = vmatpush1.msra.mxu0 0.0
    %1264 = vmatprep.subr.mxu0 0.0
    %1265 = vmatpush1.msra.mxu0 0.0
    %1266 = vmatprep.subr.mxu0 0.0
    %1267 = vmatpush1.msra.mxu0 0.0
    %1268 = vmatprep.mubr.f32.mxu0 0.0
    %1269 = vmatmul.mubr.f32.gmra.mrb[0].mxu0 %v1126
    %v1270 = vpop.f32.mrb[0].mxu0
    %v1271 = vadd.f32 0.0, %v1270
    %v1272 = vpop.f32.mrb[0].mxu0
    %1273 = vdwg.mxu0
    %v1274 = vadd.f32 %v1130, %v1200
    %v1275 = vadd.f32 %v1131, %v1202
    %v1276 = vxor.u32 %v1274, 2147483648
    %v1277 = vxor.u32 %v1275, 2147483648
    %v1278 = vmul.f32 %v1276, 1.442695
    %v1279 = vpow.pop %v1278
    %v1280 = vmul.f32 %v1277, 1.442695
    %v1281 = vpow.pop %v1280
    %v1282 = vadd.f32 %v1279, 1.0
    %v1283 = vadd.f32 %v1281, 1.0
    %v1284 = vrcp.pop %v1282
    %v1285 = vmul.f32 1.0, %v1284
    %v1286 = vrcp.pop %v1283
    %v1287 = vmul.f32 1.0, %v1286
    %v1288 = vadd.f32 %v1271, %v115
    %v1289 = vmul.f32 %v1285, %v1288
    %v1290 = vadd.f32 %v1132, %v1289
    %v1291 = vtanh.pop %v1290
    %v1292 = vsub.f32 1.0, %v1287
    %v1293 = vmul.f32 %v1292, %v1291
    %v1294 = vmul.f32 %v1287, %v1126
    %v1295 = vadd.f32 %v1293, %v1294
    %s1296 = scalar_lea.vmem [#allocation2], 48
    %1297 = vst [vmem:[%s1296] sm:$0xff] %v1295
    %s1298 = scalar_lea.vmem [#allocation3], 168
    %v1299 = vld [vmem:[%s1298] sm:$0xff]
    %v1300 = vld [vmem:[%s1298 + $0x8] sm:$0xff]
    %v1301 = vld [vmem:[%s1298 + $0x10] sm:$0xff]
    %1302 = vmatprep.subr.mxu0 %v63
    %1303 = vmatpush1.msra.mxu0 %v62
    %1304 = vmatprep.subr.mxu0 %v66
    %1305 = vmatpush1.msra.mxu0 %v65
    %1306 = vmatprep.subr.mxu0 %v69
    %1307 = vmatpush1.msra.mxu0 %v68
    %1308 = vmatprep.subr.mxu0 %v72
    %1309 = vmatpush1.msra.mxu0 %v71
    %1310 = vmatprep.subr.mxu0 %v75
    %1311 = vmatpush1.msra.mxu0 %v74
    %1312 = vmatprep.subr.mxu0 %v78
    %1313 = vmatpush1.msra.mxu0 %v77
    %1314 = vmatprep.subr.mxu0 %v81
    %1315 = vmatpush1.msra.mxu0 %v80
    %1316 = vmatprep.subr.mxu0 %v84
    %1317 = vmatpush1.msra.mxu0 %v83
    %1318 = vmatprep.subr.mxu0 %v87
    %1319 = vmatpush1.msra.mxu0 %v86
    %1320 = vmatprep.subr.mxu0 %v90
    %1321 = vmatpush1.msra.mxu0 %v89
    %1322 = vmatprep.subr.mxu0 %v93
    %1323 = vmatpush1.msra.mxu0 %v92
    %1324 = vmatprep.subr.mxu0 %v96
    %1325 = vmatpush1.msra.mxu0 %v95
    %1326 = vmatprep.subr.mxu0 %v99
    %1327 = vmatpush1.msra.mxu0 %v98
    %1328 = vmatprep.subr.mxu0 %v102
    %1329 = vmatpush1.msra.mxu0 %v101
    %1330 = vmatprep.subr.mxu0 %v105
    %1331 = vmatpush1.msra.mxu0 %v104
    %1332 = vmatprep.subr.mxu0 %v108
    %1333 = vmatpush1.msra.mxu0 %v107
    %1334 = vmatprep.subr.mxu0 0.0
    %1335 = vmatpush1.msra.mxu0 0.0
    %1336 = vmatprep.subr.mxu0 0.0
    %1337 = vmatpush1.msra.mxu0 0.0
    %1338 = vmatprep.subr.mxu0 0.0
    %1339 = vmatpush1.msra.mxu0 0.0
    %1340 = vmatprep.subr.mxu0 0.0
    %1341 = vmatpush1.msra.mxu0 0.0
    %1342 = vmatprep.subr.mxu0 0.0
    %1343 = vmatpush1.msra.mxu0 0.0
    %1344 = vmatprep.subr.mxu0 0.0
    %1345 = vmatpush1.msra.mxu0 0.0
    %1346 = vmatprep.subr.mxu0 0.0
    %1347 = vmatpush1.msra.mxu0 0.0
    %1348 = vmatprep.subr.mxu0 0.0
    %1349 = vmatpush1.msra.mxu0 0.0
    %1350 = vmatprep.subr.mxu0 0.0
    %1351 = vmatpush1.msra.mxu0 0.0
    %1352 = vmatprep.subr.mxu0 0.0
    %1353 = vmatpush1.msra.mxu0 0.0
    %1354 = vmatprep.subr.mxu0 0.0
    %1355 = vmatpush1.msra.mxu0 0.0
    %1356 = vmatprep.subr.mxu0 0.0
    %1357 = vmatpush1.msra.mxu0 0.0
    %1358 = vmatprep.subr.mxu0 0.0
    %1359 = vmatpush1.msra.mxu0 0.0
    %1360 = vmatprep.subr.mxu0 0.0
    %1361 = vmatpush1.msra.mxu0 0.0
    %1362 = vmatprep.subr.mxu0 0.0
    %1363 = vmatpush1.msra.mxu0 0.0
    %1364 = vmatprep.subr.mxu0 0.0
    %1365 = vmatpush1.msra.mxu0 0.0
    %1366 = vmatprep.mubr.f32.mxu0 0.0
    %1367 = vmatmul.mubr.f32.gmra.mrb[0].mxu0 %v1295
    %v1368 = vpop.f32.mrb[0].mxu0
    %v1369 = vadd.f32 0.0, %v1368
    %v1370 = vpop.f32.mrb[0].mxu0
    %v1371 = vadd.f32 0.0, %v1370
    %1372 = vdwg.mxu0
    %1373 = vmatprep.subr.mxu0 0.0
    %1374 = vmatpush1.msra.mxu0 %v64
    %1375 = vmatprep.subr.mxu0 0.0
    %1376 = vmatpush1.msra.mxu0 %v67
    %1377 = vmatprep.subr.mxu0 0.0
    %1378 = vmatpush1.msra.mxu0 %v70
    %1379 = vmatprep.subr.mxu0 0.0
    %1380 = vmatpush1.msra.mxu0 %v73
    %1381 = vmatprep.subr.mxu0 0.0
    %1382 = vmatpush1.msra.mxu0 %v76
    %1383 = vmatprep.subr.mxu0 0.0
    %1384 = vmatpush1.msra.mxu0 %v79
    %1385 = vmatprep.subr.mxu0 0.0
    %1386 = vmatpush1.msra.mxu0 %v82
    %1387 = vmatprep.subr.mxu0 0.0
    %1388 = vmatpush1.msra.mxu0 %v85
    %1389 = vmatprep.subr.mxu0 0.0
    %1390 = vmatpush1.msra.mxu0 %v88
    %1391 = vmatprep.subr.mxu0 0.0
    %1392 = vmatpush1.msra.mxu0 %v91
    %1393 = vmatprep.subr.mxu0 0.0
    %1394 = vmatpush1.msra.mxu0 %v94
    %1395 = vmatprep.subr.mxu0 0.0
    %1396 = vmatpush1.msra.mxu0 %v97
    %1397 = vmatprep.subr.mxu0 0.0
    %1398 = vmatpush1.msra.mxu0 %v100
    %1399 = vmatprep.subr.mxu0 0.0
    %1400 = vmatpush1.msra.mxu0 %v103
    %1401 = vmatprep.subr.mxu0 0.0
    %1402 = vmatpush1.msra.mxu0 %v106
    %1403 = vmatprep.subr.mxu0 0.0
    %1404 = vmatpush1.msra.mxu0 %v109
    %1405 = vmatprep.subr.mxu0 0.0
    %1406 = vmatpush1.msra.mxu0 0.0
    %1407 = vmatprep.subr.mxu0 0.0
    %1408 = vmatpush1.msra.mxu0 0.0
    %1409 = vmatprep.subr.mxu0 0.0
    %1410 = vmatpush1.msra.mxu0 0.0
    %1411 = vmatprep.subr.mxu0 0.0
    %1412 = vmatpush1.msra.mxu0 0.0
    %1413 = vmatprep.subr.mxu0 0.0
    %1414 = vmatpush1.msra.mxu0 0.0
    %1415 = vmatprep.subr.mxu0 0.0
    %1416 = vmatpush1.msra.mxu0 0.0
    %1417 = vmatprep.subr.mxu0 0.0
    %1418 = vmatpush1.msra.mxu0 0.0
    %1419 = vmatprep.subr.mxu0 0.0
    %1420 = vmatpush1.msra.mxu0 0.0
    %1421 = vmatprep.subr.mxu0 0.0
    %1422 = vmatpush1.msra.mxu0 0.0
    %1423 = vmatprep.subr.mxu0 0.0
    %1424 = vmatpush1.msra.mxu0 0.0
    %1425 = vmatprep.subr.mxu0 0.0
    %1426 = vmatpush1.msra.mxu0 0.0
    %1427 = vmatprep.subr.mxu0 0.0
    %1428 = vmatpush1.msra.mxu0 0.0
    %1429 = vmatprep.subr.mxu0 0.0
    %1430 = vmatpush1.msra.mxu0 0.0
    %1431 = vmatprep.subr.mxu0 0.0
    %1432 = vmatpush1.msra.mxu0 0.0
    %1433 = vmatprep.subr.mxu0 0.0
    %1434 = vmatpush1.msra.mxu0 0.0
    %1435 = vmatprep.subr.mxu0 0.0
    %1436 = vmatpush1.msra.mxu0 0.0
    %1437 = vmatprep.mubr.f32.mxu0 0.0
    %1438 = vmatmul.mubr.f32.gmra.mrb[0].mxu0 %v1295
    %v1439 = vpop.f32.mrb[0].mxu0
    %v1440 = vadd.f32 0.0, %v1439
    %v1441 = vpop.f32.mrb[0].mxu0
    %1442 = vdwg.mxu0
    %v1443 = vadd.f32 %v1299, %v1369
    %v1444 = vadd.f32 %v1300, %v1371
    %v1445 = vxor.u32 %v1443, 2147483648
    %v1446 = vxor.u32 %v1444, 2147483648
    %v1447 = vmul.f32 %v1445, 1.442695
    %v1448 = vpow.pop %v1447
    %v1449 = vmul.f32 %v1446, 1.442695
    %v1450 = vpow.pop %v1449
    %v1451 = vadd.f32 %v1448, 1.0
    %v1452 = vadd.f32 %v1450, 1.0
    %v1453 = vrcp.pop %v1451
    %v1454 = vmul.f32 1.0, %v1453
    %v1455 = vrcp.pop %v1452
    %v1456 = vmul.f32 1.0, %v1455
    %v1457 = vadd.f32 %v1440, %v115
    %v1458 = vmul.f32 %v1454, %v1457
    %v1459 = vadd.f32 %v1301, %v1458
    %v1460 = vtanh.pop %v1459
    %v1461 = vsub.f32 1.0, %v1456
    %v1462 = vmul.f32 %v1461, %v1460
    %v1463 = vmul.f32 %v1456, %v1295
    %v1464 = vadd.f32 %v1462, %v1463
    %s1465 = scalar_lea.vmem [#allocation2], 56
    %1466 = vst [vmem:[%s1465] sm:$0xff] %v1464
    %v1467 = vld [vmem:[#allocation2] sm:$0xff]
    %v1468 = vld [vmem:[#allocation2 + $0x8] sm:$0xff]
    %v1469 = vld [vmem:[#allocation2 + $0x10] sm:$0xff]
    %v1470 = vld [vmem:[#allocation2 + $0x18] sm:$0xff]
    %v1471 = vld [vmem:[#allocation2 + $0x20] sm:$0xff]
    %v1472 = vld [vmem:[#allocation2 + $0x28] sm:$0xff]
    %v1473 = vld [vmem:[#allocation2 + $0x30] sm:$0xff]
    %v1474 = vld [vmem:[#allocation2 + $0x38] sm:$0xff]
    %v1475 = vld [vmem:[#allocation8] sm:$0xff]
    %v1476 = vld [vmem:[#allocation8 + $0x8] sm:$0xff]
    %v1477 = vld [vmem:[#allocation8 + $0x10] sm:$0xff]
    %v1478 = vld [vmem:[#allocation8 + $0x18] sm:$0xff]
    %v1479 = vld [vmem:[#allocation8 + $0x20] sm:$0xff]
    %v1480 = vld [vmem:[#allocation8 + $0x28] sm:$0xff]
    %v1481 = vld [vmem:[#allocation8 + $0x30] sm:$0xff]
    %v1482 = vld [vmem:[#allocation8 + $0x38] sm:$0xff]
    %v1483 = vld [vmem:[#allocation8 + $0x40] sm:$0xff]
    %v1484 = vld [vmem:[#allocation8 + $0x48] sm:$0xff]
    %v1485 = vld [vmem:[#allocation8 + $0x50] sm:$0xff]
    %v1486 = vld [vmem:[#allocation8 + $0x58] sm:$0xff]
    %v1487 = vld [vmem:[#allocation8 + $0x60] sm:$0xff]
    %v1488 = vld [vmem:[#allocation8 + $0x68] sm:$0xff]
    %v1489 = vld [vmem:[#allocation8 + $0x70] sm:$0xff]
    %v1490 = vld [vmem:[#allocation8 + $0x78] sm:$0xff]
    %v1491 = vld [vmem:[%s4] sm:$0x1]
    %v1493 = vlaneseq
    %v1494 = vshrl.u32 %v1493, 7
    %v1495 = vsub.s32 0, %v1494
    %v1496 = vrot.slane %v1491, %v1495
    %1498 = vmatprep.subr.mxu0 0.0
    %1499 = vmatpush1.msra.mxu0 %v1475
    %1500 = vmatprep.subr.mxu0 0.0
    %1501 = vmatpush1.msra.mxu0 %v1476
    %1502 = vmatprep.subr.mxu0 0.0
    %1503 = vmatpush1.msra.mxu0 %v1477
    %1504 = vmatprep.subr.mxu0 0.0
    %1505 = vmatpush1.msra.mxu0 %v1478
    %1506 = vmatprep.subr.mxu0 0.0
    %1507 = vmatpush1.msra.mxu0 %v1479
    %1508 = vmatprep.subr.mxu0 0.0
    %1509 = vmatpush1.msra.mxu0 %v1480
    %1510 = vmatprep.subr.mxu0 0.0
    %1511 = vmatpush1.msra.mxu0 %v1481
    %1512 = vmatprep.subr.mxu0 0.0
    %1513 = vmatpush1.msra.mxu0 %v1482
    %1514 = vmatprep.subr.mxu0 0.0
    %1515 = vmatpush1.msra.mxu0 %v1483
    %1516 = vmatprep.subr.mxu0 0.0
    %1517 = vmatpush1.msra.mxu0 %v1484
    %1518 = vmatprep.subr.mxu0 0.0
    %1519 = vmatpush1.msra.mxu0 %v1485
    %1520 = vmatprep.subr.mxu0 0.0
    %1521 = vmatpush1.msra.mxu0 %v1486
    %1522 = vmatprep.subr.mxu0 0.0
    %1523 = vmatpush1.msra.mxu0 %v1487
    %1524 = vmatprep.subr.mxu0 0.0
    %1525 = vmatpush1.msra.mxu0 %v1488
    %1526 = vmatprep.subr.mxu0 0.0
    %1527 = vmatpush1.msra.mxu0 %v1489
    %1528 = vmatprep.subr.mxu0 0.0
    %1529 = vmatpush1.msra.mxu0 %v1490
    %1530 = vmatprep.subr.mxu0 0.0
    %1531 = vmatpush1.msra.mxu0 0.0
    %1532 = vmatprep.subr.mxu0 0.0
    %1533 = vmatpush1.msra.mxu0 0.0
    %1534 = vmatprep.subr.mxu0 0.0
    %1535 = vmatpush1.msra.mxu0 0.0
    %1536 = vmatprep.subr.mxu0 0.0
    %1537 = vmatpush1.msra.mxu0 0.0
    %1538 = vmatprep.subr.mxu0 0.0
    %1539 = vmatpush1.msra.mxu0 0.0
    %1540 = vmatprep.subr.mxu0 0.0
    %1541 = vmatpush1.msra.mxu0 0.0
    %1542 = vmatprep.subr.mxu0 0.0
    %1543 = vmatpush1.msra.mxu0 0.0
    %1544 = vmatprep.subr.mxu0 0.0
    %1545 = vmatpush1.msra.mxu0 0.0
    %1546 = vmatprep.subr.mxu0 0.0
    %1547 = vmatpush1.msra.mxu0 0.0
    %1548 = vmatprep.subr.mxu0 0.0
    %1549 = vmatpush1.msra.mxu0 0.0
    %1550 = vmatprep.subr.mxu0 0.0
    %1551 = vmatpush1.msra.mxu0 0.0
    %1552 = vmatprep.subr.mxu0 0.0
    %1553 = vmatpush1.msra.mxu0 0.0
    %1554 = vmatprep.subr.mxu0 0.0
    %1555 = vmatpush1.msra.mxu0 0.0
    %1556 = vmatprep.subr.mxu0 0.0
    %1557 = vmatpush1.msra.mxu0 0.0
    %1558 = vmatprep.subr.mxu0 0.0
    %1559 = vmatpush1.msra.mxu0 0.0
    %1560 = vmatprep.subr.mxu0 0.0
    %1561 = vmatpush1.msra.mxu0 0.0
    %1562 = vmatprep.mubr.f32.mxu0 0.0
    %1563 = vmatmul.mubr.f32.gmra.mrb[0].mxu0 %v1467
    %v1564 = vpop.f32.mrb[0].mxu0
    %v1565 = vadd.f32 %v1496, %v1564
    %v1566 = vpop.f32.mrb[0].mxu0
    %1567 = vmatprep.mubr.f32.mxu0 0.0
    %1568 = vmatmul.mubr.f32.gmra.mrb[0].mxu0 %v1468
    %v1569 = vpop.f32.mrb[0].mxu0
    %v1570 = vadd.f32 %v1496, %v1569
    %v1571 = vpop.f32.mrb[0].mxu0
    %1572 = vmatprep.mubr.f32.mxu0 0.0
    %1573 = vmatmul.mubr.f32.gmra.mrb[0].mxu0 %v1469
    %v1574 = vpop.f32.mrb[0].mxu0
    %v1575 = vadd.f32 %v1496, %v1574
    %v1576 = vpop.f32.mrb[0].mxu0
    %1577 = vmatprep.mubr.f32.mxu0 0.0
    %1578 = vmatmul.mubr.f32.gmra.mrb[0].mxu0 %v1470
    %v1579 = vpop.f32.mrb[0].mxu0
    %v1580 = vadd.f32 %v1496, %v1579
    %v1581 = vpop.f32.mrb[0].mxu0
    %1582 = vmatprep.mubr.f32.mxu0 0.0
    %1583 = vmatmul.mubr.f32.gmra.mrb[0].mxu0 %v1471
    %v1584 = vpop.f32.mrb[0].mxu0
    %v1585 = vadd.f32 %v1496, %v1584
    %v1586 = vpop.f32.mrb[0].mxu0
    %1587 = vmatprep.mubr.f32.mxu0 0.0
    %1588 = vmatmul.mubr.f32.gmra.mrb[0].mxu0 %v1472
    %v1589 = vpop.f32.mrb[0].mxu0
    %v1590 = vadd.f32 %v1496, %v1589
    %v1591 = vpop.f32.mrb[0].mxu0
    %1592 = vmatprep.mubr.f32.mxu0 0.0
    %1593 = vmatmul.mubr.f32.gmra.mrb[0].mxu0 %v1473
    %v1594 = vpop.f32.mrb[0].mxu0
    %v1595 = vadd.f32 %v1496, %v1594
    %v1596 = vpop.f32.mrb[0].mxu0
    %1597 = vmatprep.mubr.f32.mxu0 0.0
    %1598 = vmatmul.mubr.f32.gmra.mrb[0].mxu0 %v1474
    %v1599 = vpop.f32.mrb[0].mxu0
    %v1600 = vadd.f32 %v1496, %v1599
    %v1601 = vpop.f32.mrb[0].mxu0
    %1602 = vdwg.mxu0
    %1603 = vst [vmem:[#allocation9] sm:$0xff] %v1565
    %1604 = vst [vmem:[#allocation9 + $0x8] sm:$0xff] %v1570
    %1605 = vst [vmem:[#allocation9 + $0x10] sm:$0xff] %v1575
    %1606 = vst [vmem:[#allocation9 + $0x18] sm:$0xff] %v1580
    %1607 = vst [vmem:[#allocation9 + $0x20] sm:$0xff] %v1585
    %1608 = vst [vmem:[#allocation9 + $0x28] sm:$0xff] %v1590
    %1609 = vst [vmem:[#allocation9 + $0x30] sm:$0xff] %v1595
    %1610 = vst [vmem:[#allocation9 + $0x38] sm:$0xff] %v1600
    // Predicated region
    $region34: #{tpu_custom_call.1} parent=1 // pred_check
      _
    $region35: #{tpu_custom_call.1} parent=1 // pred_check_branch
      %1612 = sbr.rel (0) target = $region37
    $region36: #{tpu_custom_call.1} parent=1 // pred_region
      %s1614 = ssub.s32 1024, 1024
      %1615 = vsyncadd [#allocation5], %s1614
      %s1616 = sshll.u32 [#allocation9], 4
      %s1617 = int_to_ptr.vmem [resolvable:$true] %s1616
      %1622 = dma.vmem_to_hbm [thread:$0]  %s1617, 1024, %s5, [#allocation5], 128, 128, 8
    $region37: #{tpu_custom_call.1} parent=1 // pred_fallthru
      _
    // Predicated region
    $region38: #{tpu_custom_call.1} parent=1 // pred_check
      _
    $region39: #{tpu_custom_call.1} parent=1 // pred_check_branch
      %1624 = sbr.rel (0) target = $region41
    $region40: #{tpu_custom_call.1} parent=1 // pred_region
      %1625 = dma.done [#allocation5], 1024
    $region41: #{tpu_custom_call.1} parent=1 // pred_fallthru
      _
    %1626 = vsyncpa [#allocation4], 1
    %1627 = vsyncpa [#allocation7], 1
    %1628 = vsyncpa [#allocation5], 1

</llo_original>
